<compile_context>
chip_gen: v6e
topology: v6e:2x2x1
jax: 0.10.0
libtpu: 0.0.40
codegen_flags: <defaults>
</compile_context>

<pallas_src>
import functools

import jax
import jax.numpy as jnp
import numpy as np
from jax.experimental import pallas as pl
from jax.experimental.pallas import tpu as pltpu

_EPS = 1e-5


# -----------------------------------------------------------------------------
# Pallas kernel: grid = (batch, repeat).  Activation resident in VMEM scratch
# across the repeat axis; per-repeat weights streamed in by the BlockSpecs.
# -----------------------------------------------------------------------------
def _res_block_kernel(x_ref, w1_ref, b1_ref, w3_ref, b2_ref, o_ref,
                      act_ref, hpad_ref, *, use_residual):
    H = x_ref.shape[1]
    W = x_ref.shape[2]
    C = x_ref.shape[3]
    Cmid = w1_ref.shape[2]
    r = pl.program_id(1)

    @pl.when(r == 0)
    def _init():
        # Activation enters VMEM once per batch element and stays resident
        # across the repeat axis (no per-repeat HBM round trip).
        act_ref[...] = x_ref[0].reshape(H * W, C)
        # Zero only the 1-pixel border of the padded scratch: the interior is
        # fully overwritten every repeat, the border is never written.
        zrow = jnp.zeros((1, W + 2, Cmid), jnp.float32)
        hpad_ref[pl.ds(0, 1)] = zrow
        hpad_ref[pl.ds(H + 1, 1)] = zrow
        zcol = jnp.zeros((H, 1, Cmid), jnp.float32)
        hpad_ref[pl.ds(1, H), pl.ds(0, 1), :] = zcol
        hpad_ref[pl.ds(1, H), pl.ds(W + 1, 1), :] = zcol

    x = act_ref[...]                                       # (HW, C) f32

    # ---- CNNBlock #1: 1x1 conv (C -> Cmid).  BN scale folded into w1 on the
    #      host; bf16 MXU operands, f32 accumulation; shift + LeakyReLU(0.1).
    h = jnp.dot(x.astype(jnp.bfloat16), w1_ref[0],
                preferred_element_type=jnp.float32)        # (HW, Cmid)
    h = h + b1_ref[0]
    h = jnp.maximum(h, 0.1 * h)                            # leaky relu (single VPU max)

    # ---- write interior of the zero-padded scratch (padding=1).
    hpad_ref[pl.ds(1, H), pl.ds(1, W), :] = h.reshape(H, W, Cmid)

    # ---- CNNBlock #2: 3x3 conv (Cmid -> C) as ONE im2col matmul.
    # The 9 shifted taps are concatenated along the channel/lane axis so the
    # MXU contraction dim is 9*Cmid; accumulation happens inside the MXU.
    taps = [hpad_ref[pl.ds(dy, H), pl.ds(dx, W), :].reshape(H * W, Cmid)
            for dy in range(3) for dx in range(3)]
    patch = jnp.concatenate(taps, axis=-1)                 # (HW, 9*Cmid)
    y = jnp.dot(patch.astype(jnp.bfloat16), w3_ref[0],
                preferred_element_type=jnp.float32)        # (HW, C)
    y = y + b2_ref[0]
    y = jnp.maximum(y, 0.1 * y)

    # ---- residual add (static flag); carry activation for the next repeat.
    new = x + y if use_residual else y
    act_ref[...] = new

    @pl.when(r == pl.num_programs(1) - 1)
    def _finalize():
        o_ref[0] = new.reshape(H, W, C)


def _derived_vmem_limit_bytes(H, W, C, Cmid):
    """Derive the VMEM cap from actual block + scratch + weight sizes."""
    f32, bf16 = 4, 2
    io_blocks = 2 * (H * W * C * f32)                            # x block + out block
    weight_blocks = (C * Cmid + 9 * Cmid * C) * bf16 + (Cmid + C) * f32
    scratch = H * W * C * f32 + (H + 2) * (W + 2) * Cmid * f32
    need = 2 * (io_blocks + weight_blocks) + scratch             # 2x double buffering
    return int(min(2 * need + (16 << 20), 96 << 20))             # + compiler headroom


def _res_block_fused(x_nhwc, p, use_residual, num_repeats):
    N, H, W, C = x_nhwc.shape
    Cmid = p["w1"].shape[2]
    R = num_repeats
    kernel = functools.partial(_res_block_kernel, use_residual=use_residual)
    return pl.pallas_call(
        kernel,
        out_shape=jax.ShapeDtypeStruct((N, H, W, C), jnp.float32),
        grid_spec=pltpu.PrefetchScalarGridSpec(
            num_scalar_prefetch=0,
            grid=(N, R),
            in_specs=[
                pl.BlockSpec((1, H, W, C), lambda n, r: (n, 0, 0, 0)),   # x (read @ r==0)
                pl.BlockSpec((1, C, Cmid), lambda n, r: (r, 0, 0)),      # w1 (streamed)
                pl.BlockSpec((1, 1, Cmid), lambda n, r: (r, 0, 0)),      # bn1 shift
                pl.BlockSpec((1, 9 * Cmid, C), lambda n, r: (r, 0, 0)),  # w3 im2col-packed
                pl.BlockSpec((1, 1, C), lambda n, r: (r, 0, 0)),         # bn2 shift
            ],
            out_specs=pl.BlockSpec((1, H, W, C), lambda n, r: (n, 0, 0, 0)),
            scratch_shapes=[
                pltpu.VMEM((H * W, C), jnp.float32),             # resident activation
                pltpu.VMEM((H + 2, W + 2, Cmid), jnp.float32),   # zero-padded 1x1 output
            ],
        ),
        compiler_params=pltpu.CompilerParams(
            dimension_semantics=("parallel", "arbitrary"),
            vmem_limit_bytes=_derived_vmem_limit_bytes(H, W, C, Cmid),
        ),
    )(x_nhwc, p["w1"], p["b1"], p["w3"], p["b2"])


# -----------------------------------------------------------------------------
# Glue: fold BN (scale into weights, shift kept), pack weights, stack repeats.
# -----------------------------------------------------------------------------
def _fold_and_stack(raw_params):
    w1s, b1s, w3s, b2s = [], [], [], []
    for rp in raw_params:
        Cmid, C = rp["w1"].shape[0], rp["w1"].shape[1]
        s1 = rp["g1"] / jnp.sqrt(rp["v1"] + _EPS)
        b1 = rp["be1"] - rp["m1"] * s1
        s2 = rp["g2"] / jnp.sqrt(rp["v2"] + _EPS)
        b2 = rp["be2"] - rp["m2"] * s2
        # 1x1 conv: fold BN1 scale into the out-channel (Cmid) axis, then (C, Cmid).
        w1f = (rp["w1"][:, :, 0, 0] * s1[:, None]).T                  # (C, Cmid) f32
        # 3x3 conv: fold BN2 scale into the out-channel (C) axis, pack taps for
        # im2col: (C, Cmid, 3, 3) -> (ky, kx, i, o) -> (9*Cmid, C), row = (ky*3+kx)*Cmid + i.
        w3sc = rp["w3"] * s2[:, None, None, None]
        w3f = jnp.transpose(w3sc, (2, 3, 1, 0)).reshape(9 * Cmid, C)  # (9*Cmid, C) f32
        w1s.append(w1f.astype(jnp.bfloat16))
        b1s.append(b1.reshape(1, Cmid))
        w3s.append(w3f.astype(jnp.bfloat16))
        b2s.append(b2.reshape(1, C))
    return dict(
        w1=jnp.stack(w1s),                        # (R, C, Cmid)    bf16
        b1=jnp.stack(b1s),                        # (R, 1, Cmid)    f32
        w3=jnp.stack(w3s),                        # (R, 9*Cmid, C)  bf16
        b2=jnp.stack(b2s),                        # (R, 1, C)       f32
    )


def residual_block_nhwc(x_nhwc, raw_params, use_residual=True):
    """NHWC entry point — use this for chained blocks (no HBM transposes)."""
    p = _fold_and_stack(raw_params)
    return _res_block_fused(x_nhwc.astype(jnp.float32), p, use_residual,
                            len(raw_params))


def residual_block(x_nchw, raw_params, use_residual=True):
    # NCHW in / NCHW out, kept only for PyTorch-layout parity; backbones
    # should stay NHWC and call residual_block_nhwc directly.
    x = jnp.transpose(x_nchw, (0, 2, 3, 1))
    y = residual_block_nhwc(x, raw_params, use_residual)
    return jnp.transpose(y, (0, 3, 1, 2))


# -----------------------------------------------------------------------------
# Pure-JAX reference (for verification only)
# -----------------------------------------------------------------------------
def _cnn_block_ref(x, w, gamma, beta, mean, var, padding):
    y = jax.lax.conv_general_dilated(
        x, w, window_strides=(1, 1), padding=padding,
        dimension_numbers=("NCHW", "OIHW", "NCHW"),
        precision=jax.lax.Precision.HIGHEST)
    scale = gamma / jnp.sqrt(var + _EPS)
    shift = beta - mean * scale
    y = y * scale[None, :, None, None] + shift[None, :, None, None]
    return jnp.where(y > 0, y, 0.1 * y)


def residual_block_ref(x, raw_params, use_residual=True):
    for rp in raw_params:
        h = _cnn_block_ref(x, rp["w1"], rp["g1"], rp["be1"], rp["m1"], rp["v1"],
                           "VALID")
        h = _cnn_block_ref(h, rp["w3"], rp["g2"], rp["be2"], rp["m2"], rp["v2"],
                           [(1, 1), (1, 1)])
        x = x + h if use_residual else h
    return x


# -----------------------------------------------------------------------------
if __name__ == "__main__":
    key = jax.random.PRNGKey(0)
    N, C, H, W = 2, 8, 16, 16
    num_repeats = 2
    Cmid = C // 2

    keys = jax.random.split(key, 1 + num_repeats * 10)
    x = jax.random.normal(keys[0], (N, C, H, W), jnp.float32)

    raw_params = []
    ki = 1
    for _ in range(num_repeats):
        raw_params.append(dict(
            w1=jax.random.normal(keys[ki + 0], (Cmid, C, 1, 1), jnp.float32) * 0.3,
            g1=jax.random.uniform(keys[ki + 1], (Cmid,), jnp.float32, 0.5, 1.5),
            be1=jax.random.normal(keys[ki + 2], (Cmid,), jnp.float32) * 0.1,
            m1=jax.random.normal(keys[ki + 3], (Cmid,), jnp.float32) * 0.1,
            v1=jax.random.uniform(keys[ki + 4], (Cmid,), jnp.float32, 0.5, 1.5),
            w3=jax.random.normal(keys[ki + 5], (C, Cmid, 3, 3), jnp.float32) * 0.1,
            g2=jax.random.uniform(keys[ki + 6], (C,), jnp.float32, 0.5, 1.5),
            be2=jax.random.normal(keys[ki + 7], (C,), jnp.float32) * 0.1,
            m2=jax.random.normal(keys[ki + 8], (C,), jnp.float32) * 0.1,
            v2=jax.random.uniform(keys[ki + 9], (C,), jnp.float32, 0.5, 1.5),
        ))
        ki += 10

    out = residual_block(x, raw_params, use_residual=True)
    out = jax.block_until_ready(out)

    ref = residual_block_ref(x, raw_params, use_residual=True)
    assert out.shape == x.shape and out.dtype == jnp.float32
    # Intentional precision contract: bf16 MXU operands (with the BN scale
    # folded into the bf16 weights) + f32 accumulation vs the pure-f32 ref.
    np.testing.assert_allclose(np.asarray(out), np.asarray(ref),
                               rtol=2e-2, atol=5e-2)
    print("KERNEL_OK")
</pallas_src>

<mosaic_0001>
module attributes {stable_mosaic.version = 11 : i64} {
  func.func @_res_block_kernel(%arg0: i32, %arg1: i32, %arg2: memref<1x16x16x8xf32, #tpu.memory_space<vmem>>, %arg3: memref<1x8x4xbf16, #tpu.memory_space<vmem>>, %arg4: memref<1x1x4xf32, #tpu.memory_space<vmem>>, %arg5: memref<1x36x8xbf16, #tpu.memory_space<vmem>>, %arg6: memref<1x1x8xf32, #tpu.memory_space<vmem>>, %arg7: memref<1x16x16x8xf32, #tpu.memory_space<vmem>>, %arg8: memref<256x8xf32, #tpu.memory_space<vmem>>, %arg9: memref<18x18x4xf32, #tpu.memory_space<vmem>>) attributes {dimension_semantics = [#tpu.dimension_semantics<parallel>, #tpu.dimension_semantics<arbitrary>], iteration_bounds = array<i64: 2, 2>, scalar_prefetch = 0 : i64, scratch_operands = 2 : i64, tpu.core_type = #tpu.core_type<tc>, window_params = [{transform_indices = @transform_0, window_bounds = array<i64: 1, 16, 16, 8>}, {transform_indices = @transform_1, window_bounds = array<i64: 1, 8, 4>}, {transform_indices = @transform_2, window_bounds = array<i64: 1, 1, 4>}, {transform_indices = @transform_3, window_bounds = array<i64: 1, 36, 8>}, {transform_indices = @transform_4, window_bounds = array<i64: 1, 1, 8>}, {transform_indices = @transform_5, window_bounds = array<i64: 1, 16, 16, 8>}]} {
    %c0_i32 = arith.constant 0 : i32
    %0 = arith.cmpi eq, %arg1, %c0_i32 : i32
    %1 = arith.extui %0 : i1 to i32
    %c0_i32_0 = arith.constant 0 : i32
    %2 = arith.cmpi ne, %1, %c0_i32_0 : i32
    scf.if %2 {
      %c0_48 = arith.constant 0 : index
      %c0_49 = arith.constant 0 : index
      %c0_50 = arith.constant 0 : index
      %c0_51 = arith.constant 0 : index
      %52 = vector.load %arg2[%c0_48, %c0_49, %c0_50, %c0_51] : memref<1x16x16x8xf32, #tpu.memory_space<vmem>>, vector<1x16x16x8xf32>
      %53 = vector.shape_cast %52 : vector<1x16x16x8xf32> to vector<16x16x8xf32>
      %54 = vector.shape_cast %53 : vector<16x16x8xf32> to vector<256x8xf32>
      %c0_52 = arith.constant 0 : index
      %c0_53 = arith.constant 0 : index
      %55 = vector.load %arg8[%c0_52, %c0_53] : memref<256x8xf32, #tpu.memory_space<vmem>>, vector<256x8xf32>
      tpu.vector_store %arg8[%c0_52, %c0_53], %54 {strides = array<i32>} : memref<256x8xf32, #tpu.memory_space<vmem>>, vector<256x8xf32>,
      %cst_54 = arith.constant 0.000000e+00 : f32
      %56 = vector.broadcast %cst_54 : f32 to vector<1x18x4xf32>
      %c0_55 = arith.constant 0 : index
      %c0_56 = arith.constant 0 : index
      %c0_57 = arith.constant 0 : index
      %57 = vector.load %arg9[%c0_55, %c0_56, %c0_57] : memref<18x18x4xf32, #tpu.memory_space<vmem>>, vector<1x18x4xf32>
      tpu.vector_store %arg9[%c0_55, %c0_56, %c0_57], %56 {strides = array<i32>} : memref<18x18x4xf32, #tpu.memory_space<vmem>>, vector<1x18x4xf32>,
      %c17 = arith.constant 17 : index
      %c0_58 = arith.constant 0 : index
      %c0_59 = arith.constant 0 : index
      %58 = vector.load %arg9[%c17, %c0_58, %c0_59] : memref<18x18x4xf32, #tpu.memory_space<vmem>>, vector<1x18x4xf32>
      tpu.vector_store %arg9[%c17, %c0_58, %c0_59], %56 {strides = array<i32>} : memref<18x18x4xf32, #tpu.memory_space<vmem>>, vector<1x18x4xf32>,
      %cst_60 = arith.constant 0.000000e+00 : f32
      %59 = vector.broadcast %cst_60 : f32 to vector<16x1x4xf32>
      %c1_61 = arith.constant 1 : index
      %c0_62 = arith.constant 0 : index
      %c0_63 = arith.constant 0 : index
      %60 = vector.load %arg9[%c1_61, %c0_62, %c0_63] : memref<18x18x4xf32, #tpu.memory_space<vmem>>, vector<16x1x4xf32>
      tpu.vector_store %arg9[%c1_61, %c0_62, %c0_63], %59 {strides = array<i32>} : memref<18x18x4xf32, #tpu.memory_space<vmem>>, vector<16x1x4xf32>,
      %c1_64 = arith.constant 1 : index
      %c17_65 = arith.constant 17 : index
      %c0_66 = arith.constant 0 : index
      %61 = vector.load %arg9[%c1_64, %c17_65, %c0_66] : memref<18x18x4xf32, #tpu.memory_space<vmem>>, vector<16x1x4xf32>
      tpu.vector_store %arg9[%c1_64, %c17_65, %c0_66], %59 {strides = array<i32>} : memref<18x18x4xf32, #tpu.memory_space<vmem>>, vector<16x1x4xf32>,
    } else {
    }
    %c0 = arith.constant 0 : index
    %c0_1 = arith.constant 0 : index
    %3 = vector.load %arg8[%c0, %c0_1] : memref<256x8xf32, #tpu.memory_space<vmem>>, vector<256x8xf32>
    %4 = arith.truncf %3 : vector<256x8xf32> to vector<256x8xbf16>
    %c0_2 = arith.constant 0 : index
    %c0_3 = arith.constant 0 : index
    %c0_4 = arith.constant 0 : index
    %5 = vector.load %arg3[%c0_2, %c0_3, %c0_4] : memref<1x8x4xbf16, #tpu.memory_space<vmem>>, vector<1x8x4xbf16>
    %6 = vector.shape_cast %5 : vector<1x8x4xbf16> to vector<8x4xbf16>
    %cst = arith.constant dense<0.000000e+00> : vector<256x4xf32>
    %7 = tpu.matmul %4, %6, %cst {dimension_numbers = #tpu.dot_dimension_numbers<[1], [0], [0], [1], [0, 0, 1, 1], [], []>} : vector<256x8xbf16>, vector<8x4xbf16>, vector<256x4xf32> -> vector<256x4xf32>
    %c0_5 = arith.constant 0 : index
    %c0_6 = arith.constant 0 : index
    %c0_7 = arith.constant 0 : index
    %8 = vector.load %arg4[%c0_5, %c0_6, %c0_7] : memref<1x1x4xf32, #tpu.memory_space<vmem>>, vector<1x1x4xf32>
    %9 = vector.shape_cast %8 : vector<1x1x4xf32> to vector<1x4xf32>
    %10 = vector.broadcast %9 : vector<1x4xf32> to vector<256x4xf32>
    %11 = arith.addf %7, %10 : vector<256x4xf32>
    %cst_8 = arith.constant 1.000000e-01 : f32
    %12 = vector.broadcast %cst_8 : f32 to vector<256x4xf32>
    %13 = arith.mulf %12, %11 : vector<256x4xf32>
    %14 = arith.maximumf %11, %13 : vector<256x4xf32>
    %15 = vector.shape_cast %14 : vector<256x4xf32> to vector<16x16x4xf32>
    %c1 = arith.constant 1 : index
    %c1_9 = arith.constant 1 : index
    %c0_10 = arith.constant 0 : index
    %16 = vector.load %arg9[%c1, %c1_9, %c0_10] : memref<18x18x4xf32, #tpu.memory_space<vmem>>, vector<16x16x4xf32>
    tpu.vector_store %arg9[%c1, %c1_9, %c0_10], %15 {strides = array<i32>} : memref<18x18x4xf32, #tpu.memory_space<vmem>>, vector<16x16x4xf32>,
    %c0_11 = arith.constant 0 : index
    %c0_12 = arith.constant 0 : index
    %c0_13 = arith.constant 0 : index
    %17 = vector.load %arg9[%c0_11, %c0_12, %c0_13] : memref<18x18x4xf32, #tpu.memory_space<vmem>>, vector<16x16x4xf32>
    %18 = vector.shape_cast %17 : vector<16x16x4xf32> to vector<256x4xf32>
    %c0_14 = arith.constant 0 : index
    %c1_15 = arith.constant 1 : index
    %c0_16 = arith.constant 0 : index
    %19 = vector.load %arg9[%c0_14, %c1_15, %c0_16] : memref<18x18x4xf32, #tpu.memory_space<vmem>>, vector<16x16x4xf32>
    %20 = vector.shape_cast %19 : vector<16x16x4xf32> to vector<256x4xf32>
    %c0_17 = arith.constant 0 : index
    %c2 = arith.constant 2 : index
    %c0_18 = arith.constant 0 : index
    %21 = vector.load %arg9[%c0_17, %c2, %c0_18] : memref<18x18x4xf32, #tpu.memory_space<vmem>>, vector<16x16x4xf32>
    %22 = vector.shape_cast %21 : vector<16x16x4xf32> to vector<256x4xf32>
    %c1_19 = arith.constant 1 : index
    %c0_20 = arith.constant 0 : index
    %c0_21 = arith.constant 0 : index
    %23 = vector.load %arg9[%c1_19, %c0_20, %c0_21] : memref<18x18x4xf32, #tpu.memory_space<vmem>>, vector<16x16x4xf32>
    %24 = vector.shape_cast %23 : vector<16x16x4xf32> to vector<256x4xf32>
    %c1_22 = arith.constant 1 : index
    %c1_23 = arith.constant 1 : index
    %c0_24 = arith.constant 0 : index
    %25 = vector.load %arg9[%c1_22, %c1_23, %c0_24] : memref<18x18x4xf32, #tpu.memory_space<vmem>>, vector<16x16x4xf32>
    %26 = vector.shape_cast %25 : vector<16x16x4xf32> to vector<256x4xf32>
    %c1_25 = arith.constant 1 : index
    %c2_26 = arith.constant 2 : index
    %c0_27 = arith.constant 0 : index
    %27 = vector.load %arg9[%c1_25, %c2_26, %c0_27] : memref<18x18x4xf32, #tpu.memory_space<vmem>>, vector<16x16x4xf32>
    %28 = vector.shape_cast %27 : vector<16x16x4xf32> to vector<256x4xf32>
    %c2_28 = arith.constant 2 : index
    %c0_29 = arith.constant 0 : index
    %c0_30 = arith.constant 0 : index
    %29 = vector.load %arg9[%c2_28, %c0_29, %c0_30] : memref<18x18x4xf32, #tpu.memory_space<vmem>>, vector<16x16x4xf32>
    %30 = vector.shape_cast %29 : vector<16x16x4xf32> to vector<256x4xf32>
    %c2_31 = arith.constant 2 : index
    %c1_32 = arith.constant 1 : index
    %c0_33 = arith.constant 0 : index
    %31 = vector.load %arg9[%c2_31, %c1_32, %c0_33] : memref<18x18x4xf32, #tpu.memory_space<vmem>>, vector<16x16x4xf32>
    %32 = vector.shape_cast %31 : vector<16x16x4xf32> to vector<256x4xf32>
    %c2_34 = arith.constant 2 : index
    %c2_35 = arith.constant 2 : index
    %c0_36 = arith.constant 0 : index
    %33 = vector.load %arg9[%c2_34, %c2_35, %c0_36] : memref<18x18x4xf32, #tpu.memory_space<vmem>>, vector<16x16x4xf32>
    %34 = vector.shape_cast %33 : vector<16x16x4xf32> to vector<256x4xf32>
    %35 = tpu.concatenate %18, %20, %22, %24, %26, %28, %30, %32, %34 in 1 : vector<256x4xf32>, vector<256x4xf32>, vector<256x4xf32>, vector<256x4xf32>, vector<256x4xf32>, vector<256x4xf32>, vector<256x4xf32>, vector<256x4xf32>, vector<256x4xf32> -> vector<256x36xf32>
    %36 = arith.truncf %35 : vector<256x36xf32> to vector<256x36xbf16>
    %c0_37 = arith.constant 0 : index
    %c0_38 = arith.constant 0 : index
    %c0_39 = arith.constant 0 : index
    %37 = vector.load %arg5[%c0_37, %c0_38, %c0_39] : memref<1x36x8xbf16, #tpu.memory_space<vmem>>, vector<1x36x8xbf16>
    %38 = vector.shape_cast %37 : vector<1x36x8xbf16> to vector<36x8xbf16>
    %cst_40 = arith.constant dense<0.000000e+00> : vector<256x8xf32>
    %39 = tpu.matmul %36, %38, %cst_40 {dimension_numbers = #tpu.dot_dimension_numbers<[1], [0], [0], [1], [0, 0, 1, 1], [], []>} : vector<256x36xbf16>, vector<36x8xbf16>, vector<256x8xf32> -> vector<256x8xf32>
    %c0_41 = arith.constant 0 : index
    %c0_42 = arith.constant 0 : index
    %c0_43 = arith.constant 0 : index
    %40 = vector.load %arg6[%c0_41, %c0_42, %c0_43] : memref<1x1x8xf32, #tpu.memory_space<vmem>>, vector<1x1x8xf32>
    %41 = vector.shape_cast %40 : vector<1x1x8xf32> to vector<1x8xf32>
    %42 = vector.broadcast %41 : vector<1x8xf32> to vector<256x8xf32>
    %43 = arith.addf %39, %42 : vector<256x8xf32>
    %cst_44 = arith.constant 1.000000e-01 : f32
    %44 = vector.broadcast %cst_44 : f32 to vector<256x8xf32>
    %45 = arith.mulf %44, %43 : vector<256x8xf32>
    %46 = arith.maximumf %43, %45 : vector<256x8xf32>
    %47 = arith.addf %3, %46 : vector<256x8xf32>
    %c0_45 = arith.constant 0 : index
    %c0_46 = arith.constant 0 : index
    %48 = vector.load %arg8[%c0_45, %c0_46] : memref<256x8xf32, #tpu.memory_space<vmem>>, vector<256x8xf32>
    tpu.vector_store %arg8[%c0_45, %c0_46], %47 {strides = array<i32>} : memref<256x8xf32, #tpu.memory_space<vmem>>, vector<256x8xf32>,
    %c1_i32 = arith.constant 1 : i32
    %49 = arith.cmpi eq, %arg1, %c1_i32 : i32
    %50 = arith.extui %49 : i1 to i32
    %c0_i32_47 = arith.constant 0 : i32
    %51 = arith.cmpi ne, %50, %c0_i32_47 : i32
    scf.if %51 {
      %52 = vector.shape_cast %47 : vector<256x8xf32> to vector<16x16x8xf32>
      %c0_48 = arith.constant 0 : index
      %c0_49 = arith.constant 0 : index
      %c0_50 = arith.constant 0 : index
      %c0_51 = arith.constant 0 : index
      %53 = vector.load %arg7[%c0_48, %c0_49, %c0_50, %c0_51] : memref<1x16x16x8xf32, #tpu.memory_space<vmem>>, vector<1x16x16x8xf32>
      %54 = vector.shape_cast %53 : vector<1x16x16x8xf32> to vector<16x16x8xf32>
      %55 = vector.shape_cast %52 : vector<16x16x8xf32> to vector<1x16x16x8xf32>
      tpu.vector_store %arg7[%c0_48, %c0_49, %c0_50, %c0_51], %55 {strides = array<i32>} : memref<1x16x16x8xf32, #tpu.memory_space<vmem>>, vector<1x16x16x8xf32>,
    } else {
    }
    return
  }
  func.func @transform_0(%arg0: i32, %arg1: i32) -> (i32, i32, i32, i32) {
    %c0_i32 = arith.constant 0 : i32
    %c0_i32_0 = arith.constant 0 : i32
    %c0_i32_1 = arith.constant 0 : i32
    %c0_i32_2 = arith.constant 0 : i32
    return %arg0, %c0_i32, %c0_i32_0, %c0_i32_1 : i32, i32, i32, i32
  }
  func.func @transform_1(%arg0: i32, %arg1: i32) -> (i32, i32, i32) {
    %c0_i32 = arith.constant 0 : i32
    %c0_i32_0 = arith.constant 0 : i32
    %c0_i32_1 = arith.constant 0 : i32
    return %arg1, %c0_i32, %c0_i32_0 : i32, i32, i32
  }
  func.func @transform_2(%arg0: i32, %arg1: i32) -> (i32, i32, i32) {
    %c0_i32 = arith.constant 0 : i32
    %c0_i32_0 = arith.constant 0 : i32
    %c0_i32_1 = arith.constant 0 : i32
    return %arg1, %c0_i32, %c0_i32_0 : i32, i32, i32
  }
  func.func @transform_3(%arg0: i32, %arg1: i32) -> (i32, i32, i32) {
    %c0_i32 = arith.constant 0 : i32
    %c0_i32_0 = arith.constant 0 : i32
    %c0_i32_1 = arith.constant 0 : i32
    return %arg1, %c0_i32, %c0_i32_0 : i32, i32, i32
  }
  func.func @transform_4(%arg0: i32, %arg1: i32) -> (i32, i32, i32) {
    %c0_i32 = arith.constant 0 : i32
    %c0_i32_0 = arith.constant 0 : i32
    %c0_i32_1 = arith.constant 0 : i32
    return %arg1, %c0_i32, %c0_i32_0 : i32, i32, i32
  }
  func.func @transform_5(%arg0: i32, %arg1: i32) -> (i32, i32, i32, i32) {
    %c0_i32 = arith.constant 0 : i32
    %c0_i32_0 = arith.constant 0 : i32
    %c0_i32_1 = arith.constant 0 : i32
    %c0_i32_2 = arith.constant 0 : i32
    return %arg0, %c0_i32, %c0_i32_0, %c0_i32_1 : i32, i32, i32, i32
  }
}

</mosaic_0001>

<llo_original>
// kernel: tpu_custom_call.1
$region0: #{tpu_custom_call.1}
  #allocation0 [shape = 'u32[]', space=smem, size = 0x4, offset = 0x4, fixed_abs, tag = 'smem constant byte address 0x4 - core index']
  #allocation1 [shape = 'u32[144,128]{1,0:T(1,128)}', space=vmem, size = 0x12000, scoped, tag = 'internal scratch']
  #allocation2 [shape = 'f32[256,8]{1,0:T(8,128)}', space=vmem, size = 0x20000, scoped, tag = 'scratch operand']
  #allocation3 [shape = 'f32[18,18,4]{2,1,0:T(8,128)}', space=vmem, size = 0x36000, scoped, tag = 'scratch operand']
  %s0 = inlined_call_operand.vmem [shape: f32[2,16,16,8], index: 0, kind: input, shape index: {}]
  %s1 = inlined_call_operand.vmem [shape: bf16[2,8,4], index: 1, kind: input, shape index: {}]
  %s2 = inlined_call_operand.vmem [shape: f32[2,1,4], index: 2, kind: input, shape index: {}]
  %s3 = inlined_call_operand.vmem [shape: bf16[2,36,8], index: 3, kind: input, shape index: {}]
  %s4 = inlined_call_operand.vmem [shape: f32[2,1,8], index: 4, kind: input, shape index: {}]
  %s5 = inlined_call_operand.vmem [shape: f32[2,16,16,8], index: 5, kind: output, shape index: {}]
  %s6 = sld [smem:[#allocation0]]
  $region61: #{tpu_custom_call.1} parent=0
    _
  %s8 = ssub.s32 1, %s6
  %s9 = scalar_select 0, %s8, %s6
  loop: start=0, step=1, limit=6
  $region2: #{tpu_custom_call.1} parent=0 // loop_pre_header
    _
  $region3: #{tpu_custom_call.1} parent=0 // loop_header
    %s11 = sphi 0, %s15
    %p12 = scmp.ge.s32.totalorder %s11, 6
    %s18 = sphi 0, %s30
    %s19 = sphi 0, %s26
    %s20 = sphi 0, %s18
    %s21 = sphi 0, %s19
    %s22 = sphi 0, %s20
    %s23 = sphi 0, %s21
    %s33 = sphi 0, %s35
    %s36 = sphi 0, %s33
    %s37 = sphi 0, %s36
    %s53 = sphi 0, %s37
    %s59 = sphi 0, %s61
    %s62 = sphi 0, %s59
    %s63 = sphi 0, %s62
    %s79 = sphi 0, %s63
    %s85 = sphi 0, %s87
    %s88 = sphi 0, %s85
    %s89 = sphi 0, %s88
    %s105 = sphi 0, %s89
    %s111 = sphi 0, %s113
    %s114 = sphi 0, %s111
    %s115 = sphi 0, %s114
    %s131 = sphi 0, %s115
    %s137 = sphi 0, %s139
    %s140 = sphi 0, %s137
    %s141 = sphi 0, %s140
    %s157 = sphi 0, %s141
    %s163 = sphi 0, %s165
    %s166 = sphi 0, %s163
    %s167 = sphi 0, %s166
    %s183 = sphi 0, %s167
  $region4: #{tpu_custom_call.1} parent=0 // loop_header_branch
    %14 = sbr.rel (%p12) target = $region8
  $region5: #{tpu_custom_call.1} parent=0 // loop_body
    %s16 = ssub.s32 %s11, 1
    %s17 = ssub.s32 %s11, 2
    %s24 = sadd.s32 1, %s19
    %p25 = scmp.ge.s32.totalorder %s24, 2
    %s26 = scalar_select %p25, 0, %s24
    %s27 = sadd.s32 1, %s18
    %s28 = scalar_select %p25, %s27, %s18
    %p29 = scmp.ge.s32.totalorder %s28, 2
    %s30 = scalar_select %p29, 0, %s28
    %s31 = ssub.s32 %s18, %s30
    %p32 = scmp.eq.s32.totalorder %s31, 0
    %s34 = sadd.s32 %s33, 1
    %s35 = scalar_select %p32, %s33, %s34
    %p38 = pneg %p32
    %p39 = scmp.eq.s32.totalorder %s11, 3
    %p40 = por %p38, %p39
    %p41 = scmp.ne.s32.totalorder %s33, %s36
    %p42 = scmp.eq.s32.totalorder %s11, 0
    %p43 = por %p41, %p42
    %p44 = scmp.ne.s32.totalorder %s33, %s36
    %p45 = scmp.eq.s32.totalorder %s16, 3
    %p46 = por %p44, %p45
    %p47 = scmp.ne.s32.totalorder %s36, %s37
    %p48 = scmp.eq.s32.totalorder %s16, 0
    %p49 = por %p47, %p48
    %p50 = scmp.ne.s32.totalorder %s36, %s37
    %p51 = scmp.eq.s32.totalorder %s17, 3
    %p52 = por %p50, %p51
    %p54 = scmp.ne.s32.totalorder %s37, %s53
    %p55 = scmp.eq.s32.totalorder %s17, 0
    %p56 = por %p54, %p55
    %s57 = ssub.s32 %s19, %s26
    %p58 = scmp.eq.s32.totalorder %s57, 0
    %s60 = sadd.s32 %s59, 1
    %s61 = scalar_select %p58, %s59, %s60
    %p64 = pneg %p58
    %p65 = scmp.eq.s32.totalorder %s11, 3
    %p66 = por %p64, %p65
    %p67 = scmp.ne.s32.totalorder %s59, %s62
    %p68 = scmp.eq.s32.totalorder %s11, 0
    %p69 = por %p67, %p68
    %p70 = scmp.ne.s32.totalorder %s59, %s62
    %p71 = scmp.eq.s32.totalorder %s16, 3
    %p72 = por %p70, %p71
    %p73 = scmp.ne.s32.totalorder %s62, %s63
    %p74 = scmp.eq.s32.totalorder %s16, 0
    %p75 = por %p73, %p74
    %p76 = scmp.ne.s32.totalorder %s62, %s63
    %p77 = scmp.eq.s32.totalorder %s17, 3
    %p78 = por %p76, %p77
    %p80 = scmp.ne.s32.totalorder %s63, %s79
    %p81 = scmp.eq.s32.totalorder %s17, 0
    %p82 = por %p80, %p81
    %s83 = ssub.s32 %s19, %s26
    %p84 = scmp.eq.s32.totalorder %s83, 0
    %s86 = sadd.s32 %s85, 1
    %s87 = scalar_select %p84, %s85, %s86
    %p90 = pneg %p84
    %p91 = scmp.eq.s32.totalorder %s11, 3
    %p92 = por %p90, %p91
    %p93 = scmp.ne.s32.totalorder %s85, %s88
    %p94 = scmp.eq.s32.totalorder %s11, 0
    %p95 = por %p93, %p94
    %p96 = scmp.ne.s32.totalorder %s85, %s88
    %p97 = scmp.eq.s32.totalorder %s16, 3
    %p98 = por %p96, %p97
    %p99 = scmp.ne.s32.totalorder %s88, %s89
    %p100 = scmp.eq.s32.totalorder %s16, 0
    %p101 = por %p99, %p100
    %p102 = scmp.ne.s32.totalorder %s88, %s89
    %p103 = scmp.eq.s32.totalorder %s17, 3
    %p104 = por %p102, %p103
    %p106 = scmp.ne.s32.totalorder %s89, %s105
    %p107 = scmp.eq.s32.totalorder %s17, 0
    %p108 = por %p106, %p107
    %s109 = ssub.s32 %s19, %s26
    %p110 = scmp.eq.s32.totalorder %s109, 0
    %s112 = sadd.s32 %s111, 1
    %s113 = scalar_select %p110, %s111, %s112
    %p116 = pneg %p110
    %p117 = scmp.eq.s32.totalorder %s11, 3
    %p118 = por %p116, %p117
    %p119 = scmp.ne.s32.totalorder %s111, %s114
    %p120 = scmp.eq.s32.totalorder %s11, 0
    %p121 = por %p119, %p120
    %p122 = scmp.ne.s32.totalorder %s111, %s114
    %p123 = scmp.eq.s32.totalorder %s16, 3
    %p124 = por %p122, %p123
    %p125 = scmp.ne.s32.totalorder %s114, %s115
    %p126 = scmp.eq.s32.totalorder %s16, 0
    %p127 = por %p125, %p126
    %p128 = scmp.ne.s32.totalorder %s114, %s115
    %p129 = scmp.eq.s32.totalorder %s17, 3
    %p130 = por %p128, %p129
    %p132 = scmp.ne.s32.totalorder %s115, %s131
    %p133 = scmp.eq.s32.totalorder %s17, 0
    %p134 = por %p132, %p133
    %s135 = ssub.s32 %s19, %s26
    %p136 = scmp.eq.s32.totalorder %s135, 0
    %s138 = sadd.s32 %s137, 1
    %s139 = scalar_select %p136, %s137, %s138
    %p142 = pneg %p136
    %p143 = scmp.eq.s32.totalorder %s11, 3
    %p144 = por %p142, %p143
    %p145 = scmp.ne.s32.totalorder %s137, %s140
    %p146 = scmp.eq.s32.totalorder %s11, 0
    %p147 = por %p145, %p146
    %p148 = scmp.ne.s32.totalorder %s137, %s140
    %p149 = scmp.eq.s32.totalorder %s16, 3
    %p150 = por %p148, %p149
    %p151 = scmp.ne.s32.totalorder %s140, %s141
    %p152 = scmp.eq.s32.totalorder %s16, 0
    %p153 = por %p151, %p152
    %p154 = scmp.ne.s32.totalorder %s140, %s141
    %p155 = scmp.eq.s32.totalorder %s17, 3
    %p156 = por %p154, %p155
    %p158 = scmp.ne.s32.totalorder %s141, %s157
    %p159 = scmp.eq.s32.totalorder %s17, 0
    %p160 = por %p158, %p159
    %s161 = ssub.s32 %s18, %s30
    %p162 = scmp.eq.s32.totalorder %s161, 0
    %s164 = sadd.s32 %s163, 1
    %s165 = scalar_select %p162, %s163, %s164
    %p168 = pneg %p162
    %p169 = scmp.eq.s32.totalorder %s11, 3
    %p170 = por %p168, %p169
    %p171 = scmp.ne.s32.totalorder %s163, %s166
    %p172 = scmp.eq.s32.totalorder %s11, 0
    %p173 = por %p171, %p172
    %p174 = scmp.ne.s32.totalorder %s163, %s166
    %p175 = scmp.eq.s32.totalorder %s16, 3
    %p176 = por %p174, %p175
    %p177 = scmp.ne.s32.totalorder %s166, %s167
    %p178 = scmp.eq.s32.totalorder %s16, 0
    %p179 = por %p177, %p178
    %p180 = scmp.ne.s32.totalorder %s166, %s167
    %p181 = scmp.eq.s32.totalorder %s17, 3
    %p182 = por %p180, %p181
    %p184 = scmp.ne.s32.totalorder %s167, %s183
    %p185 = scmp.eq.s32.totalorder %s17, 0
    %p186 = por %p184, %p185
    %p187 = scmp.le.s32.totalorder 1, %s11
    %p188 = scmp.lt.s32.totalorder %s11, 5
    %p189 = pnand %p187, %p188
    %p190 = pneg %p189
    // Predicated region
    $region9: #{tpu_custom_call.1} parent=5 // pred_check
      _
    $region10: #{tpu_custom_call.1} parent=5 // pred_check_branch
      %192 = sbr.rel (%p189) target = $region12
    $region11: #{tpu_custom_call.1} parent=5 // pred_region
      %s193 = ssub.s32 %s11, 1
    $region12: #{tpu_custom_call.1} parent=5 // pred_fallthru
      _
    %p194 = scmp.lt.s32.totalorder %s11, 4
    // Predicated region
    $region13: #{tpu_custom_call.1} parent=5 // pred_check
      %p195 = pneg %p194
    $region14: #{tpu_custom_call.1} parent=5 // pred_check_branch
      %197 = sbr.rel (%p195) target = $region16
    $region15: #{tpu_custom_call.1} parent=5 // pred_region
      // Predicated region
      $region17: #{tpu_custom_call.1} parent=15 // pred_check
        %p198 = pneg %p43
      $region18: #{tpu_custom_call.1} parent=15 // pred_check_branch
        %200 = sbr.rel (%p198) target = $region20
      $region19: #{tpu_custom_call.1} parent=15 // pred_region
        %p201 = scmp.lt.s32.totalorder %s18, 1
        %s202 = scalar_select %p201, %s18, 1
        %s203 = smul.addr %s202, 32
        %s204 = smul.addr %s203, 8
        %s205 = scalar_lea.vmem %s0, %s204
      $region20: #{tpu_custom_call.1} parent=15 // pred_fallthru
        _
      // Predicated region
      $region21: #{tpu_custom_call.1} parent=15 // pred_check
        %p206 = pneg %p69
      $region22: #{tpu_custom_call.1} parent=15 // pred_check_branch
        %208 = sbr.rel (%p206) target = $region24
      $region23: #{tpu_custom_call.1} parent=15 // pred_region
        %p209 = scmp.lt.s32.totalorder %s19, 1
        %s210 = scalar_select %p209, %s19, 1
        %s211 = smul.addr %s210, 4
        %s212 = scalar_lea.vmem %s1, %s211
      $region24: #{tpu_custom_call.1} parent=15 // pred_fallthru
        _
      // Predicated region
      $region25: #{tpu_custom_call.1} parent=15 // pred_check
        %p213 = pneg %p95
      $region26: #{tpu_custom_call.1} parent=15 // pred_check_branch
        %215 = sbr.rel (%p213) target = $region28
      $region27: #{tpu_custom_call.1} parent=15 // pred_region
        %p216 = scmp.lt.s32.totalorder %s19, 1
        %s217 = scalar_select %p216, %s19, 1
        %s218 = scalar_lea.vmem %s2, %s217
      $region28: #{tpu_custom_call.1} parent=15 // pred_fallthru
        _
      // Predicated region
      $region29: #{tpu_custom_call.1} parent=15 // pred_check
        %p219 = pneg %p121
      $region30: #{tpu_custom_call.1} parent=15 // pred_check_branch
        %221 = sbr.rel (%p219) target = $region32
      $region31: #{tpu_custom_call.1} parent=15 // pred_region
        %p222 = scmp.lt.s32.totalorder %s19, 1
        %s223 = scalar_select %p222, %s19, 1
        %s224 = smul.addr %s223, 5
        %s225 = smul.addr %s224, 4
        %s226 = scalar_lea.vmem %s3, %s225
      $region32: #{tpu_custom_call.1} parent=15 // pred_fallthru
        _
      // Predicated region
      $region33: #{tpu_custom_call.1} parent=15 // pred_check
        %p227 = pneg %p147
      $region34: #{tpu_custom_call.1} parent=15 // pred_check_branch
        %229 = sbr.rel (%p227) target = $region36
      $region35: #{tpu_custom_call.1} parent=15 // pred_region
        %p230 = scmp.lt.s32.totalorder %s19, 1
        %s231 = scalar_select %p230, %s19, 1
        %s232 = scalar_lea.vmem %s4, %s231
      $region36: #{tpu_custom_call.1} parent=15 // pred_fallthru
        _
    $region16: #{tpu_custom_call.1} parent=5 // pred_fallthru
      _
    %p233 = scmp.le.s32.totalorder 1, %s11
    %p234 = scmp.lt.s32.totalorder %s11, 5
    %p235 = pnand %p233, %p234
    %p236 = pneg %p235
    // Predicated region
    $region37: #{tpu_custom_call.1} parent=5 // pred_check
      _
    $region38: #{tpu_custom_call.1} parent=5 // pred_check_branch
      %238 = sbr.rel (%p235) target = $region40
    $region39: #{tpu_custom_call.1} parent=5 // pred_region
      %s239 = ssub.s32 %s11, 1
      %p240 = scmp.lt.s32.totalorder %s20, 1
      %s241 = scalar_select %p240, %s20, 1
      %s242 = smul.addr %s241, 32
      %s243 = smul.addr %s242, 8
      %s244 = scalar_lea.vmem %s0, %s243
      %p245 = pneg %p49
      %p246 = pneg %p46
      %p247 = scmp.lt.s32.totalorder %s21, 1
      %s248 = scalar_select %p247, %s21, 1
      %s249 = smul.addr %s248, 4
      %s250 = scalar_lea.vmem %s1, %s249
      %p251 = pneg %p75
      %p252 = pneg %p72
      %p253 = scmp.lt.s32.totalorder %s21, 1
      %s254 = scalar_select %p253, %s21, 1
      %s255 = scalar_lea.vmem %s2, %s254
      %p256 = pneg %p101
      %p257 = pneg %p98
      %p258 = scmp.lt.s32.totalorder %s21, 1
      %s259 = scalar_select %p258, %s21, 1
      %s260 = smul.addr %s259, 5
      %s261 = smul.addr %s260, 4
      %s262 = scalar_lea.vmem %s3, %s261
      %p263 = pneg %p127
      %p264 = pneg %p124
      %p265 = scmp.lt.s32.totalorder %s21, 1
      %s266 = scalar_select %p265, %s21, 1
      %s267 = scalar_lea.vmem %s4, %s266
      %p268 = pneg %p153
      %p269 = pneg %p150
      %p270 = pneg %p179
      %p271 = pneg %p176
      %p272 = scmp.lt.s32.totalorder %s20, 1
      %s273 = scalar_select %p272, %s20, 1
      %s274 = smul.addr %s273, 32
      %s275 = smul.addr %s274, 8
      %s276 = scalar_lea.vmem %s5, %s275
      %p277 = scmp.lt.s32.totalorder %s20, 1
      %s278 = scalar_select %p277, %s20, 1
      %s279 = smul.addr %s278, 32
      %s280 = smul.addr %s279, 8
      %s281 = scalar_lea.vmem %s0, %s280
      %p282 = scmp.lt.s32.totalorder %s21, 1
      %s283 = scalar_select %p282, %s21, 1
      %s284 = smul.addr %s283, 4
      %s285 = scalar_lea.vmem %s1, %s284
      %p286 = scmp.lt.s32.totalorder %s21, 1
      %s287 = scalar_select %p286, %s21, 1
      %s288 = scalar_lea.vmem %s2, %s287
      %p289 = scmp.lt.s32.totalorder %s21, 1
      %s290 = scalar_select %p289, %s21, 1
      %s291 = smul.addr %s290, 5
      %s292 = smul.addr %s291, 4
      %s293 = scalar_lea.vmem %s3, %s292
      %p294 = scmp.lt.s32.totalorder %s21, 1
      %s295 = scalar_select %p294, %s21, 1
      %s296 = scalar_lea.vmem %s4, %s295
      %p297 = scmp.lt.s32.totalorder %s20, 1
      %s298 = scalar_select %p297, %s20, 1
      %s299 = smul.addr %s298, 32
      %s300 = smul.addr %s299, 8
      %s301 = scalar_lea.vmem %s5, %s300
      %p303 = scmp.eq.s32.totalorder %s21, 0
      // Predicated region
      $region41: #{tpu_custom_call.1} parent=39 // pred_check
        %p304 = pneg %p303
      $region42: #{tpu_custom_call.1} parent=39 // pred_check_branch
        %306 = sbr.rel (%p304) target = $region44
      $region43: #{tpu_custom_call.1} parent=39 // pred_region
        %v307 = vld [vmem:[%s281] sm:$0xff]
        %v308 = vld [vmem:[%s281 + $0x8] sm:$0xff]
        %v309 = vld [vmem:[%s281 + $0x10] sm:$0xff]
        %v310 = vld [vmem:[%s281 + $0x18] sm:$0xff]
        %v311 = vld [vmem:[%s281 + $0x20] sm:$0xff]
        %v312 = vld [vmem:[%s281 + $0x28] sm:$0xff]
        %v313 = vld [vmem:[%s281 + $0x30] sm:$0xff]
        %v314 = vld [vmem:[%s281 + $0x38] sm:$0xff]
        %v315 = vld [vmem:[%s281 + $0x40] sm:$0xff]
        %v316 = vld [vmem:[%s281 + $0x48] sm:$0xff]
        %v317 = vld [vmem:[%s281 + $0x50] sm:$0xff]
        %v318 = vld [vmem:[%s281 + $0x58] sm:$0xff]
        %v319 = vld [vmem:[%s281 + $0x60] sm:$0xff]
        %v320 = vld [vmem:[%s281 + $0x68] sm:$0xff]
        %v321 = vld [vmem:[%s281 + $0x70] sm:$0xff]
        %v322 = vld [vmem:[%s281 + $0x78] sm:$0xff]
        %v323 = vld [vmem:[%s281 + $0x80] sm:$0xff]
        %v324 = vld [vmem:[%s281 + $0x88] sm:$0xff]
        %v325 = vld [vmem:[%s281 + $0x90] sm:$0xff]
        %v326 = vld [vmem:[%s281 + $0x98] sm:$0xff]
        %v327 = vld [vmem:[%s281 + $0xa0] sm:$0xff]
        %v328 = vld [vmem:[%s281 + $0xa8] sm:$0xff]
        %v329 = vld [vmem:[%s281 + $0xb0] sm:$0xff]
        %v330 = vld [vmem:[%s281 + $0xb8] sm:$0xff]
        %v331 = vld [vmem:[%s281 + $0xc0] sm:$0xff]
        %v332 = vld [vmem:[%s281 + $0xc8] sm:$0xff]
        %v333 = vld [vmem:[%s281 + $0xd0] sm:$0xff]
        %v334 = vld [vmem:[%s281 + $0xd8] sm:$0xff]
        %v335 = vld [vmem:[%s281 + $0xe0] sm:$0xff]
        %v336 = vld [vmem:[%s281 + $0xe8] sm:$0xff]
        %v337 = vld [vmem:[%s281 + $0xf0] sm:$0xff]
        %v338 = vld [vmem:[%s281 + $0xf8] sm:$0xff]
        %vm339 = vcmask 64512
        %340 = vst.msk [vmem:[#allocation2] sm:$0xff] %vm339, %v307
        %341 = vst.msk [vmem:[#allocation2 + $0x8] sm:$0xff] %vm339, %v308
        %342 = vst.msk [vmem:[#allocation2 + $0x10] sm:$0xff] %vm339, %v309
        %343 = vst.msk [vmem:[#allocation2 + $0x18] sm:$0xff] %vm339, %v310
        %344 = vst.msk [vmem:[#allocation2 + $0x20] sm:$0xff] %vm339, %v311
        %345 = vst.msk [vmem:[#allocation2 + $0x28] sm:$0xff] %vm339, %v312
        %346 = vst.msk [vmem:[#allocation2 + $0x30] sm:$0xff] %vm339, %v313
        %347 = vst.msk [vmem:[#allocation2 + $0x38] sm:$0xff] %vm339, %v314
        %348 = vst.msk [vmem:[#allocation2 + $0x40] sm:$0xff] %vm339, %v315
        %349 = vst.msk [vmem:[#allocation2 + $0x48] sm:$0xff] %vm339, %v316
        %350 = vst.msk [vmem:[#allocation2 + $0x50] sm:$0xff] %vm339, %v317
        %351 = vst.msk [vmem:[#allocation2 + $0x58] sm:$0xff] %vm339, %v318
        %352 = vst.msk [vmem:[#allocation2 + $0x60] sm:$0xff] %vm339, %v319
        %353 = vst.msk [vmem:[#allocation2 + $0x68] sm:$0xff] %vm339, %v320
        %354 = vst.msk [vmem:[#allocation2 + $0x70] sm:$0xff] %vm339, %v321
        %355 = vst.msk [vmem:[#allocation2 + $0x78] sm:$0xff] %vm339, %v322
        %356 = vst.msk [vmem:[#allocation2 + $0x80] sm:$0xff] %vm339, %v323
        %357 = vst.msk [vmem:[#allocation2 + $0x88] sm:$0xff] %vm339, %v324
        %358 = vst.msk [vmem:[#allocation2 + $0x90] sm:$0xff] %vm339, %v325
        %359 = vst.msk [vmem:[#allocation2 + $0x98] sm:$0xff] %vm339, %v326
        %360 = vst.msk [vmem:[#allocation2 + $0xa0] sm:$0xff] %vm339, %v327
        %361 = vst.msk [vmem:[#allocation2 + $0xa8] sm:$0xff] %vm339, %v328
        %362 = vst.msk [vmem:[#allocation2 + $0xb0] sm:$0xff] %vm339, %v329
        %363 = vst.msk [vmem:[#allocation2 + $0xb8] sm:$0xff] %vm339, %v330
        %364 = vst.msk [vmem:[#allocation2 + $0xc0] sm:$0xff] %vm339, %v331
        %365 = vst.msk [vmem:[#allocation2 + $0xc8] sm:$0xff] %vm339, %v332
        %366 = vst.msk [vmem:[#allocation2 + $0xd0] sm:$0xff] %vm339, %v333
        %367 = vst.msk [vmem:[#allocation2 + $0xd8] sm:$0xff] %vm339, %v334
        %368 = vst.msk [vmem:[#allocation2 + $0xe0] sm:$0xff] %vm339, %v335
        %369 = vst.msk [vmem:[#allocation2 + $0xe8] sm:$0xff] %vm339, %v336
        %370 = vst.msk [vmem:[#allocation2 + $0xf0] sm:$0xff] %vm339, %v337
        %371 = vst.msk [vmem:[#allocation2 + $0xf8] sm:$0xff] %vm339, %v338
        %vm372 = vcmask 31744
        %373 = vst.msk [vmem:[#allocation3] sm:$0xff] %vm372, 0.0
        %374 = vst.msk [vmem:[#allocation3 + $0x8] sm:$0xff] %vm372, 0.0
        %vm375 = vcmask 25600
        %376 = vst.msk [vmem:[#allocation3 + $0x10] sm:$0x3] %vm375, 0.0
        %s377 = scalar_lea.vmem [#allocation3], 408
        %378 = vst.msk [vmem:[%s377] sm:$0xff] %vm372, 0.0
        %379 = vst.msk [vmem:[%s377 + $0x8] sm:$0xff] %vm372, 0.0
        %380 = vst.msk [vmem:[%s377 + $0x10] sm:$0x3] %vm375, 0.0
        %s381 = scalar_lea.vmem [#allocation3], 24
        %vm382 = vcmask 24576
        %383 = vst.msk [vmem:[%s381] sm:$0x1] %vm382, 0.0
        %384 = vst.msk [vmem:[%s381 + $0x18] sm:$0x1] %vm382, 0.0
        %385 = vst.msk [vmem:[%s381 + $0x30] sm:$0x1] %vm382, 0.0
        %386 = vst.msk [vmem:[%s381 + $0x48] sm:$0x1] %vm382, 0.0
        %387 = vst.msk [vmem:[%s381 + $0x60] sm:$0x1] %vm382, 0.0
        %388 = vst.msk [vmem:[%s381 + $0x78] sm:$0x1] %vm382, 0.0
        %389 = vst.msk [vmem:[%s381 + $0x90] sm:$0x1] %vm382, 0.0
        %390 = vst.msk [vmem:[%s381 + $0xa8] sm:$0x1] %vm382, 0.0
        %391 = vst.msk [vmem:[%s381 + $0xc0] sm:$0x1] %vm382, 0.0
        %392 = vst.msk [vmem:[%s381 + $0xd8] sm:$0x1] %vm382, 0.0
        %393 = vst.msk [vmem:[%s381 + $0xf0] sm:$0x1] %vm382, 0.0
        %394 = vst.msk [vmem:[%s381 + $0x108] sm:$0x1] %vm382, 0.0
        %395 = vst.msk [vmem:[%s381 + $0x120] sm:$0x1] %vm382, 0.0
        %396 = vst.msk [vmem:[%s381 + $0x138] sm:$0x1] %vm382, 0.0
        %397 = vst.msk [vmem:[%s381 + $0x150] sm:$0x1] %vm382, 0.0
        %398 = vst.msk [vmem:[%s381 + $0x168] sm:$0x1] %vm382, 0.0
        %399 = vst.msk [vmem:[%s381 + $0x11] sm:$0x1] %vm382, 0.0
        %400 = vst.msk [vmem:[%s381 + $0x29] sm:$0x1] %vm382, 0.0
        %401 = vst.msk [vmem:[%s381 + $0x41] sm:$0x1] %vm382, 0.0
        %402 = vst.msk [vmem:[%s381 + $0x59] sm:$0x1] %vm382, 0.0
        %403 = vst.msk [vmem:[%s381 + $0x71] sm:$0x1] %vm382, 0.0
        %404 = vst.msk [vmem:[%s381 + $0x89] sm:$0x1] %vm382, 0.0
        %405 = vst.msk [vmem:[%s381 + $0xa1] sm:$0x1] %vm382, 0.0
        %406 = vst.msk [vmem:[%s381 + $0xb9] sm:$0x1] %vm382, 0.0
        %407 = vst.msk [vmem:[%s381 + $0xd1] sm:$0x1] %vm382, 0.0
        %408 = vst.msk [vmem:[%s381 + $0xe9] sm:$0x1] %vm382, 0.0
        %409 = vst.msk [vmem:[%s381 + $0x101] sm:$0x1] %vm382, 0.0
        %410 = vst.msk [vmem:[%s381 + $0x119] sm:$0x1] %vm382, 0.0
        %411 = vst.msk [vmem:[%s381 + $0x131] sm:$0x1] %vm382, 0.0
        %412 = vst.msk [vmem:[%s381 + $0x149] sm:$0x1] %vm382, 0.0
        %413 = vst.msk [vmem:[%s381 + $0x161] sm:$0x1] %vm382, 0.0
        %414 = vst.msk [vmem:[%s381 + $0x179] sm:$0x1] %vm382, 0.0
      $region44: #{tpu_custom_call.1} parent=39 // pred_fallthru
        _
      %v415 = vld [vmem:[#allocation2] sm:$0xff]
      %v416 = vld [vmem:[#allocation2 + $0x8] sm:$0xff]
      %v417 = vld [vmem:[#allocation2 + $0x10] sm:$0xff]
      %v418 = vld [vmem:[#allocation2 + $0x18] sm:$0xff]
      %v419 = vld [vmem:[#allocation2 + $0x20] sm:$0xff]
      %v420 = vld [vmem:[#allocation2 + $0x28] sm:$0xff]
      %v421 = vld [vmem:[#allocation2 + $0x30] sm:$0xff]
      %v422 = vld [vmem:[#allocation2 + $0x38] sm:$0xff]
      %v423 = vld [vmem:[#allocation2 + $0x40] sm:$0xff]
      %v424 = vld [vmem:[#allocation2 + $0x48] sm:$0xff]
      %v425 = vld [vmem:[#allocation2 + $0x50] sm:$0xff]
      %v426 = vld [vmem:[#allocation2 + $0x58] sm:$0xff]
      %v427 = vld [vmem:[#allocation2 + $0x60] sm:$0xff]
      %v428 = vld [vmem:[#allocation2 + $0x68] sm:$0xff]
      %v429 = vld [vmem:[#allocation2 + $0x70] sm:$0xff]
      %v430 = vld [vmem:[#allocation2 + $0x78] sm:$0xff]
      %v431 = vld [vmem:[#allocation2 + $0x80] sm:$0xff]
      %v432 = vld [vmem:[#allocation2 + $0x88] sm:$0xff]
      %v433 = vld [vmem:[#allocation2 + $0x90] sm:$0xff]
      %v434 = vld [vmem:[#allocation2 + $0x98] sm:$0xff]
      %v435 = vld [vmem:[#allocation2 + $0xa0] sm:$0xff]
      %v436 = vld [vmem:[#allocation2 + $0xa8] sm:$0xff]
      %v437 = vld [vmem:[#allocation2 + $0xb0] sm:$0xff]
      %v438 = vld [vmem:[#allocation2 + $0xb8] sm:$0xff]
      %v439 = vld [vmem:[#allocation2 + $0xc0] sm:$0xff]
      %v440 = vld [vmem:[#allocation2 + $0xc8] sm:$0xff]
      %v441 = vld [vmem:[#allocation2 + $0xd0] sm:$0xff]
      %v442 = vld [vmem:[#allocation2 + $0xd8] sm:$0xff]
      %v443 = vld [vmem:[#allocation2 + $0xe0] sm:$0xff]
      %v444 = vld [vmem:[#allocation2 + $0xe8] sm:$0xff]
      %v445 = vld [vmem:[#allocation2 + $0xf0] sm:$0xff]
      %v446 = vld [vmem:[#allocation2 + $0xf8] sm:$0xff]
      %v447 = vpack.c.bf16 %v416, %v415
      %v448 = vpack.c.bf16 %v418, %v417
      %v449 = vpack.c.bf16 %v420, %v419
      %v450 = vpack.c.bf16 %v422, %v421
      %v451 = vpack.c.bf16 %v424, %v423
      %v452 = vpack.c.bf16 %v426, %v425
      %v453 = vpack.c.bf16 %v428, %v427
      %v454 = vpack.c.bf16 %v430, %v429
      %v455 = vpack.c.bf16 %v432, %v431
      %v456 = vpack.c.bf16 %v434, %v433
      %v457 = vpack.c.bf16 %v436, %v435
      %v458 = vpack.c.bf16 %v438, %v437
      %v459 = vpack.c.bf16 %v440, %v439
      %v460 = vpack.c.bf16 %v442, %v441
      %v461 = vpack.c.bf16 %v444, %v443
      %v462 = vpack.c.bf16 %v446, %v445
      %v463 = vld [vmem:[%s285] sm:$0xf]
      %v464 = vld [vmem:[%s288] sm:$0x1]
      %v466 = vlaneseq
      %v467 = vshrl.u32 %v466, 7
      %v468 = vsub.s32 0, %v467
      %v469 = vrot.slane %v464, %v468
      %vm471 = vcmask 64512
      %v473 = vsel %vm471, %v447, 0
      %v476 = vsel %vm471, %v448, 0
      %v479 = vsel %vm471, %v449, 0
      %v482 = vsel %vm471, %v450, 0
      %v485 = vsel %vm471, %v451, 0
      %v488 = vsel %vm471, %v452, 0
      %v491 = vsel %vm471, %v453, 0
      %v494 = vsel %vm471, %v454, 0
      %v497 = vsel %vm471, %v455, 0
      %v500 = vsel %vm471, %v456, 0
      %v503 = vsel %vm471, %v457, 0
      %v506 = vsel %vm471, %v458, 0
      %v509 = vsel %vm471, %v459, 0
      %v512 = vsel %vm471, %v460, 0
      %v515 = vsel %vm471, %v461, 0
      %v518 = vsel %vm471, %v462, 0
      %vm520 = vcmask 1043456
      %v522 = vsel %vm520, %v463, 0
      %524 = vmatprep.subr.bf16.mxu0 0
      %525 = vmatpush1.bf16.msra.mxu0 0
      %526 = vmatprep.subr.bf16.mxu0 0
      %527 = vmatpush1.bf16.msra.mxu0 0
      %528 = vmatprep.subr.bf16.mxu0 0
      %529 = vmatpush1.bf16.msra.mxu0 0
      %530 = vmatprep.subr.bf16.mxu0 0
      %531 = vmatpush1.bf16.msra.mxu0 0
      %532 = vmatprep.subr.bf16.mxu0 0
      %533 = vmatpush1.bf16.msra.mxu0 0
      %534 = vmatprep.subr.bf16.mxu0 0
      %535 = vmatpush1.bf16.msra.mxu0 0
      %536 = vmatprep.subr.bf16.mxu0 0
      %537 = vmatpush1.bf16.msra.mxu0 0
      %538 = vmatprep.subr.bf16.mxu0 0
      %539 = vmatpush1.bf16.msra.mxu0 %v522
      %540 = vmatprep.subr.bf16.mxu0 0
      %541 = vmatpush2.bf16.msra.mxu0 0
      %542 = vmatprep.subr.bf16.mxu0 0
      %543 = vmatpush2.bf16.msra.mxu0 0
      %544 = vmatprep.subr.bf16.mxu0 0
      %545 = vmatpush2.bf16.msra.mxu0 0
      %546 = vmatprep.subr.bf16.mxu0 0
      %547 = vmatpush2.bf16.msra.mxu0 0
      %548 = vmatprep.subr.bf16.mxu0 0
      %549 = vmatpush2.bf16.msra.mxu0 0
      %550 = vmatprep.subr.bf16.mxu0 0
      %551 = vmatpush2.bf16.msra.mxu0 0
      %552 = vmatprep.subr.bf16.mxu0 0
      %553 = vmatpush2.bf16.msra.mxu0 0
      %554 = vmatprep.subr.bf16.mxu0 0
      %555 = vmatpush2.bf16.msra.mxu0 0
      %556 = vmatprep.mubr.bf16.mxu0 0
      %557 = vmatmul.mubr.bf16.gmra.mxu0 %v473
      %v558 = vpop.f32.mrf.mxu0
      %v559 = vadd.f32 %v469, %v558
      %v560 = vpop.f32.mrf.mxu0
      %v561 = vpop.f32.mrf.mxu0
      %v562 = vadd.f32 %v469, %v561
      %v563 = vpop.f32.mrf.mxu0
      %564 = vmatprep.mubr.bf16.mxu0 0
      %565 = vmatmul.mubr.bf16.gmra.mxu0 %v476
      %v566 = vpop.f32.mrf.mxu0
      %v567 = vadd.f32 %v469, %v566
      %v568 = vpop.f32.mrf.mxu0
      %v569 = vpop.f32.mrf.mxu0
      %v570 = vadd.f32 %v469, %v569
      %v571 = vpop.f32.mrf.mxu0
      %572 = vmatprep.mubr.bf16.mxu0 0
      %573 = vmatmul.mubr.bf16.gmra.mxu0 %v479
      %v574 = vpop.f32.mrf.mxu0
      %v575 = vadd.f32 %v469, %v574
      %v576 = vpop.f32.mrf.mxu0
      %v577 = vpop.f32.mrf.mxu0
      %v578 = vadd.f32 %v469, %v577
      %v579 = vpop.f32.mrf.mxu0
      %580 = vmatprep.mubr.bf16.mxu0 0
      %581 = vmatmul.mubr.bf16.gmra.mxu0 %v482
      %v582 = vpop.f32.mrf.mxu0
      %v583 = vadd.f32 %v469, %v582
      %v584 = vpop.f32.mrf.mxu0
      %v585 = vpop.f32.mrf.mxu0
      %v586 = vadd.f32 %v469, %v585
      %v587 = vpop.f32.mrf.mxu0
      %588 = vmatprep.mubr.bf16.mxu0 0
      %589 = vmatmul.mubr.bf16.gmra.mxu0 %v485
      %v590 = vpop.f32.mrf.mxu0
      %v591 = vadd.f32 %v469, %v590
      %v592 = vpop.f32.mrf.mxu0
      %v593 = vpop.f32.mrf.mxu0
      %v594 = vadd.f32 %v469, %v593
      %v595 = vpop.f32.mrf.mxu0
      %596 = vmatprep.mubr.bf16.mxu0 0
      %597 = vmatmul.mubr.bf16.gmra.mxu0 %v488
      %v598 = vpop.f32.mrf.mxu0
      %v599 = vadd.f32 %v469, %v598
      %v600 = vpop.f32.mrf.mxu0
      %v601 = vpop.f32.mrf.mxu0
      %v602 = vadd.f32 %v469, %v601
      %v603 = vpop.f32.mrf.mxu0
      %604 = vmatprep.mubr.bf16.mxu0 0
      %605 = vmatmul.mubr.bf16.gmra.mxu0 %v491
      %v606 = vpop.f32.mrf.mxu0
      %v607 = vadd.f32 %v469, %v606
      %v608 = vpop.f32.mrf.mxu0
      %v609 = vpop.f32.mrf.mxu0
      %v610 = vadd.f32 %v469, %v609
      %v611 = vpop.f32.mrf.mxu0
      %612 = vmatprep.mubr.bf16.mxu0 0
      %613 = vmatmul.mubr.bf16.gmra.mxu0 %v494
      %v614 = vpop.f32.mrf.mxu0
      %v615 = vadd.f32 %v469, %v614
      %v616 = vpop.f32.mrf.mxu0
      %v617 = vpop.f32.mrf.mxu0
      %v618 = vadd.f32 %v469, %v617
      %v619 = vpop.f32.mrf.mxu0
      %620 = vmatprep.mubr.bf16.mxu0 0
      %621 = vmatmul.mubr.bf16.gmra.mxu0 %v497
      %v622 = vpop.f32.mrf.mxu0
      %v623 = vadd.f32 %v469, %v622
      %v624 = vpop.f32.mrf.mxu0
      %v625 = vpop.f32.mrf.mxu0
      %v626 = vadd.f32 %v469, %v625
      %v627 = vpop.f32.mrf.mxu0
      %628 = vmatprep.mubr.bf16.mxu0 0
      %629 = vmatmul.mubr.bf16.gmra.mxu0 %v500
      %v630 = vpop.f32.mrf.mxu0
      %v631 = vadd.f32 %v469, %v630
      %v632 = vpop.f32.mrf.mxu0
      %v633 = vpop.f32.mrf.mxu0
      %v634 = vadd.f32 %v469, %v633
      %v635 = vpop.f32.mrf.mxu0
      %636 = vmatprep.mubr.bf16.mxu0 0
      %637 = vmatmul.mubr.bf16.gmra.mxu0 %v503
      %v638 = vpop.f32.mrf.mxu0
      %v639 = vadd.f32 %v469, %v638
      %v640 = vpop.f32.mrf.mxu0
      %v641 = vpop.f32.mrf.mxu0
      %v642 = vadd.f32 %v469, %v641
      %v643 = vpop.f32.mrf.mxu0
      %644 = vmatprep.mubr.bf16.mxu0 0
      %645 = vmatmul.mubr.bf16.gmra.mxu0 %v506
      %v646 = vpop.f32.mrf.mxu0
      %v647 = vadd.f32 %v469, %v646
      %v648 = vpop.f32.mrf.mxu0
      %v649 = vpop.f32.mrf.mxu0
      %v650 = vadd.f32 %v469, %v649
      %v651 = vpop.f32.mrf.mxu0
      %652 = vmatprep.mubr.bf16.mxu0 0
      %653 = vmatmul.mubr.bf16.gmra.mxu0 %v509
      %v654 = vpop.f32.mrf.mxu0
      %v655 = vadd.f32 %v469, %v654
      %v656 = vpop.f32.mrf.mxu0
      %v657 = vpop.f32.mrf.mxu0
      %v658 = vadd.f32 %v469, %v657
      %v659 = vpop.f32.mrf.mxu0
      %660 = vmatprep.mubr.bf16.mxu0 0
      %661 = vmatmul.mubr.bf16.gmra.mxu0 %v512
      %v662 = vpop.f32.mrf.mxu0
      %v663 = vadd.f32 %v469, %v662
      %v664 = vpop.f32.mrf.mxu0
      %v665 = vpop.f32.mrf.mxu0
      %v666 = vadd.f32 %v469, %v665
      %v667 = vpop.f32.mrf.mxu0
      %668 = vmatprep.mubr.bf16.mxu0 0
      %669 = vmatmul.mubr.bf16.gmra.mxu0 %v515
      %v670 = vpop.f32.mrf.mxu0
      %v671 = vadd.f32 %v469, %v670
      %v672 = vpop.f32.mrf.mxu0
      %v673 = vpop.f32.mrf.mxu0
      %v674 = vadd.f32 %v469, %v673
      %v675 = vpop.f32.mrf.mxu0
      %676 = vmatprep.mubr.bf16.mxu0 0
      %677 = vmatmul.mubr.bf16.gmra.mxu0 %v518
      %v678 = vpop.f32.mrf.mxu0
      %v679 = vadd.f32 %v469, %v678
      %v680 = vpop.f32.mrf.mxu0
      %v681 = vpop.f32.mrf.mxu0
      %v682 = vadd.f32 %v469, %v681
      %v683 = vpop.f32.mrf.mxu0
      %684 = vdwg.mxu0
      %v685 = vmul.f32 %v559, 0.1
      %v686 = vmul.f32 %v562, 0.1
      %v687 = vmul.f32 %v567, 0.1
      %v688 = vmul.f32 %v570, 0.1
      %v689 = vmul.f32 %v575, 0.1
      %v690 = vmul.f32 %v578, 0.1
      %v691 = vmul.f32 %v583, 0.1
      %v692 = vmul.f32 %v586, 0.1
      %v693 = vmul.f32 %v591, 0.1
      %v694 = vmul.f32 %v594, 0.1
      %v695 = vmul.f32 %v599, 0.1
      %v696 = vmul.f32 %v602, 0.1
      %v697 = vmul.f32 %v607, 0.1
      %v698 = vmul.f32 %v610, 0.1
      %v699 = vmul.f32 %v615, 0.1
      %v700 = vmul.f32 %v618, 0.1
      %v701 = vmul.f32 %v623, 0.1
      %v702 = vmul.f32 %v626, 0.1
      %v703 = vmul.f32 %v631, 0.1
      %v704 = vmul.f32 %v634, 0.1
      %v705 = vmul.f32 %v639, 0.1
      %v706 = vmul.f32 %v642, 0.1
      %v707 = vmul.f32 %v647, 0.1
      %v708 = vmul.f32 %v650, 0.1
      %v709 = vmul.f32 %v655, 0.1
      %v710 = vmul.f32 %v658, 0.1
      %v711 = vmul.f32 %v663, 0.1
      %v712 = vmul.f32 %v666, 0.1
      %v713 = vmul.f32 %v671, 0.1
      %v714 = vmul.f32 %v674, 0.1
      %v715 = vmul.f32 %v679, 0.1
      %v716 = vmul.f32 %v682, 0.1
      %v717 = vmax.f32 %v559, %v685
      %v718 = vmax.f32 %v562, %v686
      %v719 = vmax.f32 %v567, %v687
      %v720 = vmax.f32 %v570, %v688
      %v721 = vmax.f32 %v575, %v689
      %v722 = vmax.f32 %v578, %v690
      %v723 = vmax.f32 %v583, %v691
      %v724 = vmax.f32 %v586, %v692
      %v725 = vmax.f32 %v591, %v693
      %v726 = vmax.f32 %v594, %v694
      %v727 = vmax.f32 %v599, %v695
      %v728 = vmax.f32 %v602, %v696
      %v729 = vmax.f32 %v607, %v697
      %v730 = vmax.f32 %v610, %v698
      %v731 = vmax.f32 %v615, %v699
      %v732 = vmax.f32 %v618, %v700
      %v733 = vmax.f32 %v623, %v701
      %v734 = vmax.f32 %v626, %v702
      %v735 = vmax.f32 %v631, %v703
      %v736 = vmax.f32 %v634, %v704
      %v737 = vmax.f32 %v639, %v705
      %v738 = vmax.f32 %v642, %v706
      %v739 = vmax.f32 %v647, %v707
      %v740 = vmax.f32 %v650, %v708
      %v741 = vmax.f32 %v655, %v709
      %v742 = vmax.f32 %v658, %v710
      %v743 = vmax.f32 %v663, %v711
      %v744 = vmax.f32 %v666, %v712
      %v745 = vmax.f32 %v671, %v713
      %v746 = vmax.f32 %v674, %v714
      %v747 = vmax.f32 %v679, %v715
      %v748 = vmax.f32 %v682, %v716
      %s749 = scalar_lea.vmem [#allocation3], 24
      %vm750 = vcmask 31744
      %751 = vst.msk [vmem:[%s749 + $0x1] sm:$0xff] %vm750, %v717
      %752 = vst.msk [vmem:[%s749 + $0x9] sm:$0xff] %vm750, %v718
      %753 = vst.msk [vmem:[%s749 + $0x19] sm:$0xff] %vm750, %v719
      %754 = vst.msk [vmem:[%s749 + $0x21] sm:$0xff] %vm750, %v720
      %755 = vst.msk [vmem:[%s749 + $0x31] sm:$0xff] %vm750, %v721
      %756 = vst.msk [vmem:[%s749 + $0x39] sm:$0xff] %vm750, %v722
      %757 = vst.msk [vmem:[%s749 + $0x49] sm:$0xff] %vm750, %v723
      %758 = vst.msk [vmem:[%s749 + $0x51] sm:$0xff] %vm750, %v724
      %759 = vst.msk [vmem:[%s749 + $0x61] sm:$0xff] %vm750, %v725
      %760 = vst.msk [vmem:[%s749 + $0x69] sm:$0xff] %vm750, %v726
      %761 = vst.msk [vmem:[%s749 + $0x79] sm:$0xff] %vm750, %v727
      %762 = vst.msk [vmem:[%s749 + $0x81] sm:$0xff] %vm750, %v728
      %763 = vst.msk [vmem:[%s749 + $0x91] sm:$0xff] %vm750, %v729
      %764 = vst.msk [vmem:[%s749 + $0x99] sm:$0xff] %vm750, %v730
      %765 = vst.msk [vmem:[%s749 + $0xa9] sm:$0xff] %vm750, %v731
      %766 = vst.msk [vmem:[%s749 + $0xb1] sm:$0xff] %vm750, %v732
      %767 = vst.msk [vmem:[%s749 + $0xc1] sm:$0xff] %vm750, %v733
      %768 = vst.msk [vmem:[%s749 + $0xc9] sm:$0xff] %vm750, %v734
      %769 = vst.msk [vmem:[%s749 + $0xd9] sm:$0xff] %vm750, %v735
      %770 = vst.msk [vmem:[%s749 + $0xe1] sm:$0xff] %vm750, %v736
      %771 = vst.msk [vmem:[%s749 + $0xf1] sm:$0xff] %vm750, %v737
      %772 = vst.msk [vmem:[%s749 + $0xf9] sm:$0xff] %vm750, %v738
      %773 = vst.msk [vmem:[%s749 + $0x109] sm:$0xff] %vm750, %v739
      %774 = vst.msk [vmem:[%s749 + $0x111] sm:$0xff] %vm750, %v740
      %775 = vst.msk [vmem:[%s749 + $0x121] sm:$0xff] %vm750, %v741
      %776 = vst.msk [vmem:[%s749 + $0x129] sm:$0xff] %vm750, %v742
      %777 = vst.msk [vmem:[%s749 + $0x139] sm:$0xff] %vm750, %v743
      %778 = vst.msk [vmem:[%s749 + $0x141] sm:$0xff] %vm750, %v744
      %779 = vst.msk [vmem:[%s749 + $0x151] sm:$0xff] %vm750, %v745
      %780 = vst.msk [vmem:[%s749 + $0x159] sm:$0xff] %vm750, %v746
      %781 = vst.msk [vmem:[%s749 + $0x169] sm:$0xff] %vm750, %v747
      %782 = vst.msk [vmem:[%s749 + $0x171] sm:$0xff] %vm750, %v748
      %v783 = vld [vmem:[#allocation3] sm:$0xff]
      %v784 = vld [vmem:[#allocation3 + $0x8] sm:$0xff]
      %v785 = vld [vmem:[#allocation3 + $0x18] sm:$0xff]
      %v786 = vld [vmem:[#allocation3 + $0x20] sm:$0xff]
      %v787 = vld [vmem:[#allocation3 + $0x30] sm:$0xff]
      %v788 = vld [vmem:[#allocation3 + $0x38] sm:$0xff]
      %v789 = vld [vmem:[#allocation3 + $0x48] sm:$0xff]
      %v790 = vld [vmem:[#allocation3 + $0x50] sm:$0xff]
      %v791 = vld [vmem:[#allocation3 + $0x60] sm:$0xff]
      %v792 = vld [vmem:[#allocation3 + $0x68] sm:$0xff]
      %v793 = vld [vmem:[#allocation3 + $0x78] sm:$0xff]
      %v794 = vld [vmem:[#allocation3 + $0x80] sm:$0xff]
      %v795 = vld [vmem:[#allocation3 + $0x90] sm:$0xff]
      %v796 = vld [vmem:[#allocation3 + $0x98] sm:$0xff]
      %v797 = vld [vmem:[#allocation3 + $0xa8] sm:$0xff]
      %v798 = vld [vmem:[#allocation3 + $0xb0] sm:$0xff]
      %v799 = vld [vmem:[#allocation3 + $0xc0] sm:$0xff]
      %v800 = vld [vmem:[#allocation3 + $0xc8] sm:$0xff]
      %v801 = vld [vmem:[#allocation3 + $0xd8] sm:$0xff]
      %v802 = vld [vmem:[#allocation3 + $0xe0] sm:$0xff]
      %v803 = vld [vmem:[#allocation3 + $0xf0] sm:$0xff]
      %v804 = vld [vmem:[#allocation3 + $0xf8] sm:$0xff]
      %v805 = vld [vmem:[#allocation3 + $0x108] sm:$0xff]
      %v806 = vld [vmem:[#allocation3 + $0x110] sm:$0xff]
      %v807 = vld [vmem:[#allocation3 + $0x120] sm:$0xff]
      %v808 = vld [vmem:[#allocation3 + $0x128] sm:$0xff]
      %v809 = vld [vmem:[#allocation3 + $0x138] sm:$0xff]
      %v810 = vld [vmem:[#allocation3 + $0x140] sm:$0xff]
      %v811 = vld [vmem:[#allocation3 + $0x150] sm:$0xff]
      %v812 = vld [vmem:[#allocation3 + $0x158] sm:$0xff]
      %v813 = vld [vmem:[#allocation3 + $0x168] sm:$0xff]
      %v814 = vld [vmem:[#allocation3 + $0x170] sm:$0xff]
      %v815 = vld [vmem:[#allocation3 + $0x1] sm:$0xff]
      %v816 = vld [vmem:[#allocation3 + $0x9] sm:$0xff]
      %v817 = vld [vmem:[#allocation3 + $0x19] sm:$0xff]
      %v818 = vld [vmem:[#allocation3 + $0x21] sm:$0xff]
      %v819 = vld [vmem:[#allocation3 + $0x31] sm:$0xff]
      %v820 = vld [vmem:[#allocation3 + $0x39] sm:$0xff]
      %v821 = vld [vmem:[#allocation3 + $0x49] sm:$0xff]
      %v822 = vld [vmem:[#allocation3 + $0x51] sm:$0xff]
      %v823 = vld [vmem:[#allocation3 + $0x61] sm:$0xff]
      %v824 = vld [vmem:[#allocation3 + $0x69] sm:$0xff]
      %v825 = vld [vmem:[#allocation3 + $0x79] sm:$0xff]
      %v826 = vld [vmem:[#allocation3 + $0x81] sm:$0xff]
      %v827 = vld [vmem:[#allocation3 + $0x91] sm:$0xff]
      %v828 = vld [vmem:[#allocation3 + $0x99] sm:$0xff]
      %v829 = vld [vmem:[#allocation3 + $0xa9] sm:$0xff]
      %v830 = vld [vmem:[#allocation3 + $0xb1] sm:$0xff]
      %v831 = vld [vmem:[#allocation3 + $0xc1] sm:$0xff]
      %v832 = vld [vmem:[#allocation3 + $0xc9] sm:$0xff]
      %v833 = vld [vmem:[#allocation3 + $0xd9] sm:$0xff]
      %v834 = vld [vmem:[#allocation3 + $0xe1] sm:$0xff]
      %v835 = vld [vmem:[#allocation3 + $0xf1] sm:$0xff]
      %v836 = vld [vmem:[#allocation3 + $0xf9] sm:$0xff]
      %v837 = vld [vmem:[#allocation3 + $0x109] sm:$0xff]
      %v838 = vld [vmem:[#allocation3 + $0x111] sm:$0xff]
      %v839 = vld [vmem:[#allocation3 + $0x121] sm:$0xff]
      %v840 = vld [vmem:[#allocation3 + $0x129] sm:$0xff]
      %v841 = vld [vmem:[#allocation3 + $0x139] sm:$0xff]
      %v842 = vld [vmem:[#allocation3 + $0x141] sm:$0xff]
      %v843 = vld [vmem:[#allocation3 + $0x151] sm:$0xff]
      %v844 = vld [vmem:[#allocation3 + $0x159] sm:$0xff]
      %v845 = vld [vmem:[#allocation3 + $0x169] sm:$0xff]
      %v846 = vld [vmem:[#allocation3 + $0x171] sm:$0xff]
      %v847 = vld [vmem:[#allocation3 + $0x2] sm:$0xff]
      %v848 = vld [vmem:[#allocation3 + $0xa] sm:$0xff]
      %v849 = vld [vmem:[#allocation3 + $0x1a] sm:$0xff]
      %v850 = vld [vmem:[#allocation3 + $0x22] sm:$0xff]
      %v851 = vld [vmem:[#allocation3 + $0x32] sm:$0xff]
      %v852 = vld [vmem:[#allocation3 + $0x3a] sm:$0xff]
      %v853 = vld [vmem:[#allocation3 + $0x4a] sm:$0xff]
      %v854 = vld [vmem:[#allocation3 + $0x52] sm:$0xff]
      %v855 = vld [vmem:[#allocation3 + $0x62] sm:$0xff]
      %v856 = vld [vmem:[#allocation3 + $0x6a] sm:$0xff]
      %v857 = vld [vmem:[#allocation3 + $0x7a] sm:$0xff]
      %v858 = vld [vmem:[#allocation3 + $0x82] sm:$0xff]
      %v859 = vld [vmem:[#allocation3 + $0x92] sm:$0xff]
      %v860 = vld [vmem:[#allocation3 + $0x9a] sm:$0xff]
      %v861 = vld [vmem:[#allocation3 + $0xaa] sm:$0xff]
      %v862 = vld [vmem:[#allocation3 + $0xb2] sm:$0xff]
      %v863 = vld [vmem:[#allocation3 + $0xc2] sm:$0xff]
      %v864 = vld [vmem:[#allocation3 + $0xca] sm:$0xff]
      %v865 = vld [vmem:[#allocation3 + $0xda] sm:$0xff]
      %v866 = vld [vmem:[#allocation3 + $0xe2] sm:$0xff]
      %v867 = vld [vmem:[#allocation3 + $0xf2] sm:$0xff]
      %v868 = vld [vmem:[#allocation3 + $0xfa] sm:$0xff]
      %v869 = vld [vmem:[#allocation3 + $0x10a] sm:$0xff]
      %v870 = vld [vmem:[#allocation3 + $0x112] sm:$0xff]
      %v871 = vld [vmem:[#allocation3 + $0x122] sm:$0xff]
      %v872 = vld [vmem:[#allocation3 + $0x12a] sm:$0xff]
      %v873 = vld [vmem:[#allocation3 + $0x13a] sm:$0xff]
      %v874 = vld [vmem:[#allocation3 + $0x142] sm:$0xff]
      %v875 = vld [vmem:[#allocation3 + $0x152] sm:$0xff]
      %v876 = vld [vmem:[#allocation3 + $0x15a] sm:$0xff]
      %v877 = vld [vmem:[#allocation3 + $0x16a] sm:$0xff]
      %v878 = vld [vmem:[#allocation3 + $0x172] sm:$0xff]
      %v879 = vld [vmem:[%s749] sm:$0xff]
      %v880 = vld [vmem:[%s749 + $0x8] sm:$0xff]
      %v881 = vld [vmem:[%s749 + $0x18] sm:$0xff]
      %v882 = vld [vmem:[%s749 + $0x20] sm:$0xff]
      %v883 = vld [vmem:[%s749 + $0x30] sm:$0xff]
      %v884 = vld [vmem:[%s749 + $0x38] sm:$0xff]
      %v885 = vld [vmem:[%s749 + $0x48] sm:$0xff]
      %v886 = vld [vmem:[%s749 + $0x50] sm:$0xff]
      %v887 = vld [vmem:[%s749 + $0x60] sm:$0xff]
      %v888 = vld [vmem:[%s749 + $0x68] sm:$0xff]
      %v889 = vld [vmem:[%s749 + $0x78] sm:$0xff]
      %v890 = vld [vmem:[%s749 + $0x80] sm:$0xff]
      %v891 = vld [vmem:[%s749 + $0x90] sm:$0xff]
      %v892 = vld [vmem:[%s749 + $0x98] sm:$0xff]
      %v893 = vld [vmem:[%s749 + $0xa8] sm:$0xff]
      %v894 = vld [vmem:[%s749 + $0xb0] sm:$0xff]
      %v895 = vld [vmem:[%s749 + $0xc0] sm:$0xff]
      %v896 = vld [vmem:[%s749 + $0xc8] sm:$0xff]
      %v897 = vld [vmem:[%s749 + $0xd8] sm:$0xff]
      %v898 = vld [vmem:[%s749 + $0xe0] sm:$0xff]
      %v899 = vld [vmem:[%s749 + $0xf0] sm:$0xff]
      %v900 = vld [vmem:[%s749 + $0xf8] sm:$0xff]
      %v901 = vld [vmem:[%s749 + $0x108] sm:$0xff]
      %v902 = vld [vmem:[%s749 + $0x110] sm:$0xff]
      %v903 = vld [vmem:[%s749 + $0x120] sm:$0xff]
      %v904 = vld [vmem:[%s749 + $0x128] sm:$0xff]
      %v905 = vld [vmem:[%s749 + $0x138] sm:$0xff]
      %v906 = vld [vmem:[%s749 + $0x140] sm:$0xff]
      %v907 = vld [vmem:[%s749 + $0x150] sm:$0xff]
      %v908 = vld [vmem:[%s749 + $0x158] sm:$0xff]
      %v909 = vld [vmem:[%s749 + $0x168] sm:$0xff]
      %v910 = vld [vmem:[%s749 + $0x170] sm:$0xff]
      %v911 = vld [vmem:[%s749 + $0x1] sm:$0xff]
      %v912 = vld [vmem:[%s749 + $0x9] sm:$0xff]
      %v913 = vld [vmem:[%s749 + $0x19] sm:$0xff]
      %v914 = vld [vmem:[%s749 + $0x21] sm:$0xff]
      %v915 = vld [vmem:[%s749 + $0x31] sm:$0xff]
      %v916 = vld [vmem:[%s749 + $0x39] sm:$0xff]
      %v917 = vld [vmem:[%s749 + $0x49] sm:$0xff]
      %v918 = vld [vmem:[%s749 + $0x51] sm:$0xff]
      %v919 = vld [vmem:[%s749 + $0x61] sm:$0xff]
      %v920 = vld [vmem:[%s749 + $0x69] sm:$0xff]
      %v921 = vld [vmem:[%s749 + $0x79] sm:$0xff]
      %v922 = vld [vmem:[%s749 + $0x81] sm:$0xff]
      %v923 = vld [vmem:[%s749 + $0x91] sm:$0xff]
      %v924 = vld [vmem:[%s749 + $0x99] sm:$0xff]
      %v925 = vld [vmem:[%s749 + $0xa9] sm:$0xff]
      %v926 = vld [vmem:[%s749 + $0xb1] sm:$0xff]
      %v927 = vld [vmem:[%s749 + $0xc1] sm:$0xff]
      %v928 = vld [vmem:[%s749 + $0xc9] sm:$0xff]
      %v929 = vld [vmem:[%s749 + $0xd9] sm:$0xff]
      %v930 = vld [vmem:[%s749 + $0xe1] sm:$0xff]
      %v931 = vld [vmem:[%s749 + $0xf1] sm:$0xff]
      %v932 = vld [vmem:[%s749 + $0xf9] sm:$0xff]
      %v933 = vld [vmem:[%s749 + $0x109] sm:$0xff]
      %v934 = vld [vmem:[%s749 + $0x111] sm:$0xff]
      %v935 = vld [vmem:[%s749 + $0x121] sm:$0xff]
      %v936 = vld [vmem:[%s749 + $0x129] sm:$0xff]
      %v937 = vld [vmem:[%s749 + $0x139] sm:$0xff]
      %v938 = vld [vmem:[%s749 + $0x141] sm:$0xff]
      %v939 = vld [vmem:[%s749 + $0x151] sm:$0xff]
      %v940 = vld [vmem:[%s749 + $0x159] sm:$0xff]
      %v941 = vld [vmem:[%s749 + $0x169] sm:$0xff]
      %v942 = vld [vmem:[%s749 + $0x171] sm:$0xff]
      %v943 = vld [vmem:[%s749 + $0x2] sm:$0xff]
      %v944 = vld [vmem:[%s749 + $0xa] sm:$0xff]
      %v945 = vld [vmem:[%s749 + $0x1a] sm:$0xff]
      %v946 = vld [vmem:[%s749 + $0x22] sm:$0xff]
      %v947 = vld [vmem:[%s749 + $0x32] sm:$0xff]
      %v948 = vld [vmem:[%s749 + $0x3a] sm:$0xff]
      %v949 = vld [vmem:[%s749 + $0x4a] sm:$0xff]
      %v950 = vld [vmem:[%s749 + $0x52] sm:$0xff]
      %v951 = vld [vmem:[%s749 + $0x62] sm:$0xff]
      %v952 = vld [vmem:[%s749 + $0x6a] sm:$0xff]
      %v953 = vld [vmem:[%s749 + $0x7a] sm:$0xff]
      %v954 = vld [vmem:[%s749 + $0x82] sm:$0xff]
      %v955 = vld [vmem:[%s749 + $0x92] sm:$0xff]
      %v956 = vld [vmem:[%s749 + $0x9a] sm:$0xff]
      %v957 = vld [vmem:[%s749 + $0xaa] sm:$0xff]
      %v958 = vld [vmem:[%s749 + $0xb2] sm:$0xff]
      %v959 = vld [vmem:[%s749 + $0xc2] sm:$0xff]
      %v960 = vld [vmem:[%s749 + $0xca] sm:$0xff]
      %v961 = vld [vmem:[%s749 + $0xda] sm:$0xff]
      %v962 = vld [vmem:[%s749 + $0xe2] sm:$0xff]
      %v963 = vld [vmem:[%s749 + $0xf2] sm:$0xff]
      %v964 = vld [vmem:[%s749 + $0xfa] sm:$0xff]
      %v965 = vld [vmem:[%s749 + $0x10a] sm:$0xff]
      %v966 = vld [vmem:[%s749 + $0x112] sm:$0xff]
      %v967 = vld [vmem:[%s749 + $0x122] sm:$0xff]
      %v968 = vld [vmem:[%s749 + $0x12a] sm:$0xff]
      %v969 = vld [vmem:[%s749 + $0x13a] sm:$0xff]
      %v970 = vld [vmem:[%s749 + $0x142] sm:$0xff]
      %v971 = vld [vmem:[%s749 + $0x152] sm:$0xff]
      %v972 = vld [vmem:[%s749 + $0x15a] sm:$0xff]
      %v973 = vld [vmem:[%s749 + $0x16a] sm:$0xff]
      %v974 = vld [vmem:[%s749 + $0x172] sm:$0xff]
      %s975 = scalar_lea.vmem [#allocation3], 48
      %v976 = vld [vmem:[%s975] sm:$0xff]
      %v977 = vld [vmem:[%s975 + $0x8] sm:$0xff]
      %v978 = vld [vmem:[%s975 + $0x18] sm:$0xff]
      %v979 = vld [vmem:[%s975 + $0x20] sm:$0xff]
      %v980 = vld [vmem:[%s975 + $0x30] sm:$0xff]
      %v981 = vld [vmem:[%s975 + $0x38] sm:$0xff]
      %v982 = vld [vmem:[%s975 + $0x48] sm:$0xff]
      %v983 = vld [vmem:[%s975 + $0x50] sm:$0xff]
      %v984 = vld [vmem:[%s975 + $0x60] sm:$0xff]
      %v985 = vld [vmem:[%s975 + $0x68] sm:$0xff]
      %v986 = vld [vmem:[%s975 + $0x78] sm:$0xff]
      %v987 = vld [vmem:[%s975 + $0x80] sm:$0xff]
      %v988 = vld [vmem:[%s975 + $0x90] sm:$0xff]
      %v989 = vld [vmem:[%s975 + $0x98] sm:$0xff]
      %v990 = vld [vmem:[%s975 + $0xa8] sm:$0xff]
      %v991 = vld [vmem:[%s975 + $0xb0] sm:$0xff]
      %v992 = vld [vmem:[%s975 + $0xc0] sm:$0xff]
      %v993 = vld [vmem:[%s975 + $0xc8] sm:$0xff]
      %v994 = vld [vmem:[%s975 + $0xd8] sm:$0xff]
      %v995 = vld [vmem:[%s975 + $0xe0] sm:$0xff]
      %v996 = vld [vmem:[%s975 + $0xf0] sm:$0xff]
      %v997 = vld [vmem:[%s975 + $0xf8] sm:$0xff]
      %v998 = vld [vmem:[%s975 + $0x108] sm:$0xff]
      %v999 = vld [vmem:[%s975 + $0x110] sm:$0xff]
      %v1000 = vld [vmem:[%s975 + $0x120] sm:$0xff]
      %v1001 = vld [vmem:[%s975 + $0x128] sm:$0xff]
      %v1002 = vld [vmem:[%s975 + $0x138] sm:$0xff]
      %v1003 = vld [vmem:[%s975 + $0x140] sm:$0xff]
      %v1004 = vld [vmem:[%s975 + $0x150] sm:$0xff]
      %v1005 = vld [vmem:[%s975 + $0x158] sm:$0xff]
      %v1006 = vld [vmem:[%s975 + $0x168] sm:$0xff]
      %v1007 = vld [vmem:[%s975 + $0x170] sm:$0xff]
      %v1008 = vld [vmem:[%s975 + $0x1] sm:$0xff]
      %v1009 = vld [vmem:[%s975 + $0x9] sm:$0xff]
      %v1010 = vld [vmem:[%s975 + $0x19] sm:$0xff]
      %v1011 = vld [vmem:[%s975 + $0x21] sm:$0xff]
      %v1012 = vld [vmem:[%s975 + $0x31] sm:$0xff]
      %v1013 = vld [vmem:[%s975 + $0x39] sm:$0xff]
      %v1014 = vld [vmem:[%s975 + $0x49] sm:$0xff]
      %v1015 = vld [vmem:[%s975 + $0x51] sm:$0xff]
      %v1016 = vld [vmem:[%s975 + $0x61] sm:$0xff]
      %v1017 = vld [vmem:[%s975 + $0x69] sm:$0xff]
      %v1018 = vld [vmem:[%s975 + $0x79] sm:$0xff]
      %v1019 = vld [vmem:[%s975 + $0x81] sm:$0xff]
      %v1020 = vld [vmem:[%s975 + $0x91] sm:$0xff]
      %v1021 = vld [vmem:[%s975 + $0x99] sm:$0xff]
      %v1022 = vld [vmem:[%s975 + $0xa9] sm:$0xff]
      %v1023 = vld [vmem:[%s975 + $0xb1] sm:$0xff]
      %v1024 = vld [vmem:[%s975 + $0xc1] sm:$0xff]
      %v1025 = vld [vmem:[%s975 + $0xc9] sm:$0xff]
      %v1026 = vld [vmem:[%s975 + $0xd9] sm:$0xff]
      %v1027 = vld [vmem:[%s975 + $0xe1] sm:$0xff]
      %v1028 = vld [vmem:[%s975 + $0xf1] sm:$0xff]
      %v1029 = vld [vmem:[%s975 + $0xf9] sm:$0xff]
      %v1030 = vld [vmem:[%s975 + $0x109] sm:$0xff]
      %v1031 = vld [vmem:[%s975 + $0x111] sm:$0xff]
      %v1032 = vld [vmem:[%s975 + $0x121] sm:$0xff]
      %v1033 = vld [vmem:[%s975 + $0x129] sm:$0xff]
      %v1034 = vld [vmem:[%s975 + $0x139] sm:$0xff]
      %v1035 = vld [vmem:[%s975 + $0x141] sm:$0xff]
      %v1036 = vld [vmem:[%s975 + $0x151] sm:$0xff]
      %v1037 = vld [vmem:[%s975 + $0x159] sm:$0xff]
      %v1038 = vld [vmem:[%s975 + $0x169] sm:$0xff]
      %v1039 = vld [vmem:[%s975 + $0x171] sm:$0xff]
      %v1040 = vld [vmem:[%s975 + $0x2] sm:$0xff]
      %v1041 = vld [vmem:[%s975 + $0xa] sm:$0xff]
      %v1042 = vld [vmem:[%s975 + $0x1a] sm:$0xff]
      %v1043 = vld [vmem:[%s975 + $0x22] sm:$0xff]
      %v1044 = vld [vmem:[%s975 + $0x32] sm:$0xff]
      %v1045 = vld [vmem:[%s975 + $0x3a] sm:$0xff]
      %v1046 = vld [vmem:[%s975 + $0x4a] sm:$0xff]
      %v1047 = vld [vmem:[%s975 + $0x52] sm:$0xff]
      %v1048 = vld [vmem:[%s975 + $0x62] sm:$0xff]
      %v1049 = vld [vmem:[%s975 + $0x6a] sm:$0xff]
      %v1050 = vld [vmem:[%s975 + $0x7a] sm:$0xff]
      %v1051 = vld [vmem:[%s975 + $0x82] sm:$0xff]
      %v1052 = vld [vmem:[%s975 + $0x92] sm:$0xff]
      %v1053 = vld [vmem:[%s975 + $0x9a] sm:$0xff]
      %v1054 = vld [vmem:[%s975 + $0xaa] sm:$0xff]
      %v1055 = vld [vmem:[%s975 + $0xb2] sm:$0xff]
      %v1056 = vld [vmem:[%s975 + $0xc2] sm:$0xff]
      %v1057 = vld [vmem:[%s975 + $0xca] sm:$0xff]
      %v1058 = vld [vmem:[%s975 + $0xda] sm:$0xff]
      %v1059 = vld [vmem:[%s975 + $0xe2] sm:$0xff]
      %v1060 = vld [vmem:[%s975 + $0xf2] sm:$0xff]
      %v1061 = vld [vmem:[%s975 + $0xfa] sm:$0xff]
      %v1062 = vld [vmem:[%s975 + $0x10a] sm:$0xff]
      %v1063 = vld [vmem:[%s975 + $0x112] sm:$0xff]
      %v1064 = vld [vmem:[%s975 + $0x122] sm:$0xff]
      %v1065 = vld [vmem:[%s975 + $0x12a] sm:$0xff]
      %v1066 = vld [vmem:[%s975 + $0x13a] sm:$0xff]
      %v1067 = vld [vmem:[%s975 + $0x142] sm:$0xff]
      %v1068 = vld [vmem:[%s975 + $0x152] sm:$0xff]
      %v1069 = vld [vmem:[%s975 + $0x15a] sm:$0xff]
      %v1070 = vld [vmem:[%s975 + $0x16a] sm:$0xff]
      %v1071 = vld [vmem:[%s975 + $0x172] sm:$0xff]
      %1104 = vrot.lane.b32.xlu0 %v815, 4
      %v1105 = vpop.permute.xlu0 %1104
      %1106 = vrot.lane.b32.xlu0 %v816, 4
      %v1107 = vpop.permute.xlu0 %1106
      %1108 = vrot.lane.b32.xlu0 %v817, 4
      %v1109 = vpop.permute.xlu0 %1108
      %1110 = vrot.lane.b32.xlu0 %v818, 4
      %v1111 = vpop.permute.xlu0 %1110
      %1112 = vrot.lane.b32.xlu0 %v819, 4
      %v1113 = vpop.permute.xlu0 %1112
      %1114 = vrot.lane.b32.xlu0 %v820, 4
      %v1115 = vpop.permute.xlu0 %1114
      %1116 = vrot.lane.b32.xlu0 %v821, 4
      %v1117 = vpop.permute.xlu0 %1116
      %1118 = vrot.lane.b32.xlu0 %v822, 4
      %v1119 = vpop.permute.xlu0 %1118
      %1120 = vrot.lane.b32.xlu0 %v823, 4
      %v1121 = vpop.permute.xlu0 %1120
      %1122 = vrot.lane.b32.xlu0 %v824, 4
      %v1123 = vpop.permute.xlu0 %1122
      %1124 = vrot.lane.b32.xlu0 %v825, 4
      %v1125 = vpop.permute.xlu0 %1124
      %1126 = vrot.lane.b32.xlu0 %v826, 4
      %v1127 = vpop.permute.xlu0 %1126
      %1128 = vrot.lane.b32.xlu0 %v827, 4
      %v1129 = vpop.permute.xlu0 %1128
      %1130 = vrot.lane.b32.xlu0 %v828, 4
      %v1131 = vpop.permute.xlu0 %1130
      %1132 = vrot.lane.b32.xlu0 %v829, 4
      %v1133 = vpop.permute.xlu0 %1132
      %1134 = vrot.lane.b32.xlu0 %v830, 4
      %v1135 = vpop.permute.xlu0 %1134
      %1136 = vrot.lane.b32.xlu0 %v831, 4
      %v1137 = vpop.permute.xlu0 %1136
      %1138 = vrot.lane.b32.xlu0 %v832, 4
      %v1139 = vpop.permute.xlu0 %1138
      %1140 = vrot.lane.b32.xlu0 %v833, 4
      %v1141 = vpop.permute.xlu0 %1140
      %1142 = vrot.lane.b32.xlu0 %v834, 4
      %v1143 = vpop.permute.xlu0 %1142
      %1144 = vrot.lane.b32.xlu0 %v835, 4
      %v1145 = vpop.permute.xlu0 %1144
      %1146 = vrot.lane.b32.xlu0 %v836, 4
      %v1147 = vpop.permute.xlu0 %1146
      %1148 = vrot.lane.b32.xlu0 %v837, 4
      %v1149 = vpop.permute.xlu0 %1148
      %1150 = vrot.lane.b32.xlu0 %v838, 4
      %v1151 = vpop.permute.xlu0 %1150
      %1152 = vrot.lane.b32.xlu0 %v839, 4
      %v1153 = vpop.permute.xlu0 %1152
      %1154 = vrot.lane.b32.xlu0 %v840, 4
      %v1155 = vpop.permute.xlu0 %1154
      %1156 = vrot.lane.b32.xlu0 %v841, 4
      %v1157 = vpop.permute.xlu0 %1156
      %1158 = vrot.lane.b32.xlu0 %v842, 4
      %v1159 = vpop.permute.xlu0 %1158
      %1160 = vrot.lane.b32.xlu0 %v843, 4
      %v1161 = vpop.permute.xlu0 %1160
      %1162 = vrot.lane.b32.xlu0 %v844, 4
      %v1163 = vpop.permute.xlu0 %1162
      %1164 = vrot.lane.b32.xlu0 %v845, 4
      %v1165 = vpop.permute.xlu0 %1164
      %1166 = vrot.lane.b32.xlu0 %v846, 4
      %v1167 = vpop.permute.xlu0 %1166
      %1232 = vrot.lane.b32.xlu0 %v847, 8
      %v1233 = vpop.permute.xlu0 %1232
      %1234 = vrot.lane.b32.xlu0 %v848, 8
      %v1235 = vpop.permute.xlu0 %1234
      %1236 = vrot.lane.b32.xlu0 %v849, 8
      %v1237 = vpop.permute.xlu0 %1236
      %1238 = vrot.lane.b32.xlu0 %v850, 8
      %v1239 = vpop.permute.xlu0 %1238
      %1240 = vrot.lane.b32.xlu0 %v851, 8
      %v1241 = vpop.permute.xlu0 %1240
      %1242 = vrot.lane.b32.xlu0 %v852, 8
      %v1243 = vpop.permute.xlu0 %1242
      %1244 = vrot.lane.b32.xlu0 %v853, 8
      %v1245 = vpop.permute.xlu0 %1244
      %1246 = vrot.lane.b32.xlu0 %v854, 8
      %v1247 = vpop.permute.xlu0 %1246
      %1248 = vrot.lane.b32.xlu0 %v855, 8
      %v1249 = vpop.permute.xlu0 %1248
      %1250 = vrot.lane.b32.xlu0 %v856, 8
      %v1251 = vpop.permute.xlu0 %1250
      %1252 = vrot.lane.b32.xlu0 %v857, 8
      %v1253 = vpop.permute.xlu0 %1252
      %1254 = vrot.lane.b32.xlu0 %v858, 8
      %v1255 = vpop.permute.xlu0 %1254
      %1256 = vrot.lane.b32.xlu0 %v859, 8
      %v1257 = vpop.permute.xlu0 %1256
      %1258 = vrot.lane.b32.xlu0 %v860, 8
      %v1259 = vpop.permute.xlu0 %1258
      %1260 = vrot.lane.b32.xlu0 %v861, 8
      %v1261 = vpop.permute.xlu0 %1260
      %1262 = vrot.lane.b32.xlu0 %v862, 8
      %v1263 = vpop.permute.xlu0 %1262
      %1264 = vrot.lane.b32.xlu0 %v863, 8
      %v1265 = vpop.permute.xlu0 %1264
      %1266 = vrot.lane.b32.xlu0 %v864, 8
      %v1267 = vpop.permute.xlu0 %1266
      %1268 = vrot.lane.b32.xlu0 %v865, 8
      %v1269 = vpop.permute.xlu0 %1268
      %1270 = vrot.lane.b32.xlu0 %v866, 8
      %v1271 = vpop.permute.xlu0 %1270
      %1272 = vrot.lane.b32.xlu0 %v867, 8
      %v1273 = vpop.permute.xlu0 %1272
      %1274 = vrot.lane.b32.xlu0 %v868, 8
      %v1275 = vpop.permute.xlu0 %1274
      %1276 = vrot.lane.b32.xlu0 %v869, 8
      %v1277 = vpop.permute.xlu0 %1276
      %1278 = vrot.lane.b32.xlu0 %v870, 8
      %v1279 = vpop.permute.xlu0 %1278
      %1280 = vrot.lane.b32.xlu0 %v871, 8
      %v1281 = vpop.permute.xlu0 %1280
      %1282 = vrot.lane.b32.xlu0 %v872, 8
      %v1283 = vpop.permute.xlu0 %1282
      %1284 = vrot.lane.b32.xlu0 %v873, 8
      %v1285 = vpop.permute.xlu0 %1284
      %1286 = vrot.lane.b32.xlu0 %v874, 8
      %v1287 = vpop.permute.xlu0 %1286
      %1288 = vrot.lane.b32.xlu0 %v875, 8
      %v1289 = vpop.permute.xlu0 %1288
      %1290 = vrot.lane.b32.xlu0 %v876, 8
      %v1291 = vpop.permute.xlu0 %1290
      %1292 = vrot.lane.b32.xlu0 %v877, 8
      %v1293 = vpop.permute.xlu0 %1292
      %1294 = vrot.lane.b32.xlu0 %v878, 8
      %v1295 = vpop.permute.xlu0 %1294
      %1360 = vrot.lane.b32.xlu0 %v879, 12
      %v1361 = vpop.permute.xlu0 %1360
      %1362 = vrot.lane.b32.xlu0 %v880, 12
      %v1363 = vpop.permute.xlu0 %1362
      %1364 = vrot.lane.b32.xlu0 %v881, 12
      %v1365 = vpop.permute.xlu0 %1364
      %1366 = vrot.lane.b32.xlu0 %v882, 12
      %v1367 = vpop.permute.xlu0 %1366
      %1368 = vrot.lane.b32.xlu0 %v883, 12
      %v1369 = vpop.permute.xlu0 %1368
      %1370 = vrot.lane.b32.xlu0 %v884, 12
      %v1371 = vpop.permute.xlu0 %1370
      %1372 = vrot.lane.b32.xlu0 %v885, 12
      %v1373 = vpop.permute.xlu0 %1372
      %1374 = vrot.lane.b32.xlu0 %v886, 12
      %v1375 = vpop.permute.xlu0 %1374
      %1376 = vrot.lane.b32.xlu0 %v887, 12
      %v1377 = vpop.permute.xlu0 %1376
      %1378 = vrot.lane.b32.xlu0 %v888, 12
      %v1379 = vpop.permute.xlu0 %1378
      %1380 = vrot.lane.b32.xlu0 %v889, 12
      %v1381 = vpop.permute.xlu0 %1380
      %1382 = vrot.lane.b32.xlu0 %v890, 12
      %v1383 = vpop.permute.xlu0 %1382
      %1384 = vrot.lane.b32.xlu0 %v891, 12
      %v1385 = vpop.permute.xlu0 %1384
      %1386 = vrot.lane.b32.xlu0 %v892, 12
      %v1387 = vpop.permute.xlu0 %1386
      %1388 = vrot.lane.b32.xlu0 %v893, 12
      %v1389 = vpop.permute.xlu0 %1388
      %1390 = vrot.lane.b32.xlu0 %v894, 12
      %v1391 = vpop.permute.xlu0 %1390
      %1392 = vrot.lane.b32.xlu0 %v895, 12
      %v1393 = vpop.permute.xlu0 %1392
      %1394 = vrot.lane.b32.xlu0 %v896, 12
      %v1395 = vpop.permute.xlu0 %1394
      %1396 = vrot.lane.b32.xlu0 %v897, 12
      %v1397 = vpop.permute.xlu0 %1396
      %1398 = vrot.lane.b32.xlu0 %v898, 12
      %v1399 = vpop.permute.xlu0 %1398
      %1400 = vrot.lane.b32.xlu0 %v899, 12
      %v1401 = vpop.permute.xlu0 %1400
      %1402 = vrot.lane.b32.xlu0 %v900, 12
      %v1403 = vpop.permute.xlu0 %1402
      %1404 = vrot.lane.b32.xlu0 %v901, 12
      %v1405 = vpop.permute.xlu0 %1404
      %1406 = vrot.lane.b32.xlu0 %v902, 12
      %v1407 = vpop.permute.xlu0 %1406
      %1408 = vrot.lane.b32.xlu0 %v903, 12
      %v1409 = vpop.permute.xlu0 %1408
      %1410 = vrot.lane.b32.xlu0 %v904, 12
      %v1411 = vpop.permute.xlu0 %1410
      %1412 = vrot.lane.b32.xlu0 %v905, 12
      %v1413 = vpop.permute.xlu0 %1412
      %1414 = vrot.lane.b32.xlu0 %v906, 12
      %v1415 = vpop.permute.xlu0 %1414
      %1416 = vrot.lane.b32.xlu0 %v907, 12
      %v1417 = vpop.permute.xlu0 %1416
      %1418 = vrot.lane.b32.xlu0 %v908, 12
      %v1419 = vpop.permute.xlu0 %1418
      %1420 = vrot.lane.b32.xlu0 %v909, 12
      %v1421 = vpop.permute.xlu0 %1420
      %1422 = vrot.lane.b32.xlu0 %v910, 12
      %v1423 = vpop.permute.xlu0 %1422
      %1488 = vrot.lane.b32.xlu0 %v911, 16
      %v1489 = vpop.permute.xlu0 %1488
      %1490 = vrot.lane.b32.xlu0 %v912, 16
      %v1491 = vpop.permute.xlu0 %1490
      %1492 = vrot.lane.b32.xlu0 %v913, 16
      %v1493 = vpop.permute.xlu0 %1492
      %1494 = vrot.lane.b32.xlu0 %v914, 16
      %v1495 = vpop.permute.xlu0 %1494
      %1496 = vrot.lane.b32.xlu0 %v915, 16
      %v1497 = vpop.permute.xlu0 %1496
      %1498 = vrot.lane.b32.xlu0 %v916, 16
      %v1499 = vpop.permute.xlu0 %1498
      %1500 = vrot.lane.b32.xlu0 %v917, 16
      %v1501 = vpop.permute.xlu0 %1500
      %1502 = vrot.lane.b32.xlu0 %v918, 16
      %v1503 = vpop.permute.xlu0 %1502
      %1504 = vrot.lane.b32.xlu0 %v919, 16
      %v1505 = vpop.permute.xlu0 %1504
      %1506 = vrot.lane.b32.xlu0 %v920, 16
      %v1507 = vpop.permute.xlu0 %1506
      %1508 = vrot.lane.b32.xlu0 %v921, 16
      %v1509 = vpop.permute.xlu0 %1508
      %1510 = vrot.lane.b32.xlu0 %v922, 16
      %v1511 = vpop.permute.xlu0 %1510
      %1512 = vrot.lane.b32.xlu0 %v923, 16
      %v1513 = vpop.permute.xlu0 %1512
      %1514 = vrot.lane.b32.xlu0 %v924, 16
      %v1515 = vpop.permute.xlu0 %1514
      %1516 = vrot.lane.b32.xlu0 %v925, 16
      %v1517 = vpop.permute.xlu0 %1516
      %1518 = vrot.lane.b32.xlu0 %v926, 16
      %v1519 = vpop.permute.xlu0 %1518
      %1520 = vrot.lane.b32.xlu0 %v927, 16
      %v1521 = vpop.permute.xlu0 %1520
      %1522 = vrot.lane.b32.xlu0 %v928, 16
      %v1523 = vpop.permute.xlu0 %1522
      %1524 = vrot.lane.b32.xlu0 %v929, 16
      %v1525 = vpop.permute.xlu0 %1524
      %1526 = vrot.lane.b32.xlu0 %v930, 16
      %v1527 = vpop.permute.xlu0 %1526
      %1528 = vrot.lane.b32.xlu0 %v931, 16
      %v1529 = vpop.permute.xlu0 %1528
      %1530 = vrot.lane.b32.xlu0 %v932, 16
      %v1531 = vpop.permute.xlu0 %1530
      %1532 = vrot.lane.b32.xlu0 %v933, 16
      %v1533 = vpop.permute.xlu0 %1532
      %1534 = vrot.lane.b32.xlu0 %v934, 16
      %v1535 = vpop.permute.xlu0 %1534
      %1536 = vrot.lane.b32.xlu0 %v935, 16
      %v1537 = vpop.permute.xlu0 %1536
      %1538 = vrot.lane.b32.xlu0 %v936, 16
      %v1539 = vpop.permute.xlu0 %1538
      %1540 = vrot.lane.b32.xlu0 %v937, 16
      %v1541 = vpop.permute.xlu0 %1540
      %1542 = vrot.lane.b32.xlu0 %v938, 16
      %v1543 = vpop.permute.xlu0 %1542
      %1544 = vrot.lane.b32.xlu0 %v939, 16
      %v1545 = vpop.permute.xlu0 %1544
      %1546 = vrot.lane.b32.xlu0 %v940, 16
      %v1547 = vpop.permute.xlu0 %1546
      %1548 = vrot.lane.b32.xlu0 %v941, 16
      %v1549 = vpop.permute.xlu0 %1548
      %1550 = vrot.lane.b32.xlu0 %v942, 16
      %v1551 = vpop.permute.xlu0 %1550
      %1616 = vrot.lane.b32.xlu0 %v943, 20
      %v1617 = vpop.permute.xlu0 %1616
      %1618 = vrot.lane.b32.xlu0 %v944, 20
      %v1619 = vpop.permute.xlu0 %1618
      %1620 = vrot.lane.b32.xlu0 %v945, 20
      %v1621 = vpop.permute.xlu0 %1620
      %1622 = vrot.lane.b32.xlu0 %v946, 20
      %v1623 = vpop.permute.xlu0 %1622
      %1624 = vrot.lane.b32.xlu0 %v947, 20
      %v1625 = vpop.permute.xlu0 %1624
      %1626 = vrot.lane.b32.xlu0 %v948, 20
      %v1627 = vpop.permute.xlu0 %1626
      %1628 = vrot.lane.b32.xlu0 %v949, 20
      %v1629 = vpop.permute.xlu0 %1628
      %1630 = vrot.lane.b32.xlu0 %v950, 20
      %v1631 = vpop.permute.xlu0 %1630
      %1632 = vrot.lane.b32.xlu0 %v951, 20
      %v1633 = vpop.permute.xlu0 %1632
      %1634 = vrot.lane.b32.xlu0 %v952, 20
      %v1635 = vpop.permute.xlu0 %1634
      %1636 = vrot.lane.b32.xlu0 %v953, 20
      %v1637 = vpop.permute.xlu0 %1636
      %1638 = vrot.lane.b32.xlu0 %v954, 20
      %v1639 = vpop.permute.xlu0 %1638
      %1640 = vrot.lane.b32.xlu0 %v955, 20
      %v1641 = vpop.permute.xlu0 %1640
      %1642 = vrot.lane.b32.xlu0 %v956, 20
      %v1643 = vpop.permute.xlu0 %1642
      %1644 = vrot.lane.b32.xlu0 %v957, 20
      %v1645 = vpop.permute.xlu0 %1644
      %1646 = vrot.lane.b32.xlu0 %v958, 20
      %v1647 = vpop.permute.xlu0 %1646
      %1648 = vrot.lane.b32.xlu0 %v959, 20
      %v1649 = vpop.permute.xlu0 %1648
      %1650 = vrot.lane.b32.xlu0 %v960, 20
      %v1651 = vpop.permute.xlu0 %1650
      %1652 = vrot.lane.b32.xlu0 %v961, 20
      %v1653 = vpop.permute.xlu0 %1652
      %1654 = vrot.lane.b32.xlu0 %v962, 20
      %v1655 = vpop.permute.xlu0 %1654
      %1656 = vrot.lane.b32.xlu0 %v963, 20
      %v1657 = vpop.permute.xlu0 %1656
      %1658 = vrot.lane.b32.xlu0 %v964, 20
      %v1659 = vpop.permute.xlu0 %1658
      %1660 = vrot.lane.b32.xlu0 %v965, 20
      %v1661 = vpop.permute.xlu0 %1660
      %1662 = vrot.lane.b32.xlu0 %v966, 20
      %v1663 = vpop.permute.xlu0 %1662
      %1664 = vrot.lane.b32.xlu0 %v967, 20
      %v1665 = vpop.permute.xlu0 %1664
      %1666 = vrot.lane.b32.xlu0 %v968, 20
      %v1667 = vpop.permute.xlu0 %1666
      %1668 = vrot.lane.b32.xlu0 %v969, 20
      %v1669 = vpop.permute.xlu0 %1668
      %1670 = vrot.lane.b32.xlu0 %v970, 20
      %v1671 = vpop.permute.xlu0 %1670
      %1672 = vrot.lane.b32.xlu0 %v971, 20
      %v1673 = vpop.permute.xlu0 %1672
      %1674 = vrot.lane.b32.xlu0 %v972, 20
      %v1675 = vpop.permute.xlu0 %1674
      %1676 = vrot.lane.b32.xlu0 %v973, 20
      %v1677 = vpop.permute.xlu0 %1676
      %1678 = vrot.lane.b32.xlu0 %v974, 20
      %v1679 = vpop.permute.xlu0 %1678
      %1744 = vrot.lane.b32.xlu0 %v976, 24
      %v1745 = vpop.permute.xlu0 %1744
      %1746 = vrot.lane.b32.xlu0 %v977, 24
      %v1747 = vpop.permute.xlu0 %1746
      %1748 = vrot.lane.b32.xlu0 %v978, 24
      %v1749 = vpop.permute.xlu0 %1748
      %1750 = vrot.lane.b32.xlu0 %v979, 24
      %v1751 = vpop.permute.xlu0 %1750
      %1752 = vrot.lane.b32.xlu0 %v980, 24
      %v1753 = vpop.permute.xlu0 %1752
      %1754 = vrot.lane.b32.xlu0 %v981, 24
      %v1755 = vpop.permute.xlu0 %1754
      %1756 = vrot.lane.b32.xlu0 %v982, 24
      %v1757 = vpop.permute.xlu0 %1756
      %1758 = vrot.lane.b32.xlu0 %v983, 24
      %v1759 = vpop.permute.xlu0 %1758
      %1760 = vrot.lane.b32.xlu0 %v984, 24
      %v1761 = vpop.permute.xlu0 %1760
      %1762 = vrot.lane.b32.xlu0 %v985, 24
      %v1763 = vpop.permute.xlu0 %1762
      %1764 = vrot.lane.b32.xlu0 %v986, 24
      %v1765 = vpop.permute.xlu0 %1764
      %1766 = vrot.lane.b32.xlu0 %v987, 24
      %v1767 = vpop.permute.xlu0 %1766
      %1768 = vrot.lane.b32.xlu0 %v988, 24
      %v1769 = vpop.permute.xlu0 %1768
      %1770 = vrot.lane.b32.xlu0 %v989, 24
      %v1771 = vpop.permute.xlu0 %1770
      %1772 = vrot.lane.b32.xlu0 %v990, 24
      %v1773 = vpop.permute.xlu0 %1772
      %1774 = vrot.lane.b32.xlu0 %v991, 24
      %v1775 = vpop.permute.xlu0 %1774
      %1776 = vrot.lane.b32.xlu0 %v992, 24
      %v1777 = vpop.permute.xlu0 %1776
      %1778 = vrot.lane.b32.xlu0 %v993, 24
      %v1779 = vpop.permute.xlu0 %1778
      %1780 = vrot.lane.b32.xlu0 %v994, 24
      %v1781 = vpop.permute.xlu0 %1780
      %1782 = vrot.lane.b32.xlu0 %v995, 24
      %v1783 = vpop.permute.xlu0 %1782
      %1784 = vrot.lane.b32.xlu0 %v996, 24
      %v1785 = vpop.permute.xlu0 %1784
      %1786 = vrot.lane.b32.xlu0 %v997, 24
      %v1787 = vpop.permute.xlu0 %1786
      %1788 = vrot.lane.b32.xlu0 %v998, 24
      %v1789 = vpop.permute.xlu0 %1788
      %1790 = vrot.lane.b32.xlu0 %v999, 24
      %v1791 = vpop.permute.xlu0 %1790
      %1792 = vrot.lane.b32.xlu0 %v1000, 24
      %v1793 = vpop.permute.xlu0 %1792
      %1794 = vrot.lane.b32.xlu0 %v1001, 24
      %v1795 = vpop.permute.xlu0 %1794
      %1796 = vrot.lane.b32.xlu0 %v1002, 24
      %v1797 = vpop.permute.xlu0 %1796
      %1798 = vrot.lane.b32.xlu0 %v1003, 24
      %v1799 = vpop.permute.xlu0 %1798
      %1800 = vrot.lane.b32.xlu0 %v1004, 24
      %v1801 = vpop.permute.xlu0 %1800
      %1802 = vrot.lane.b32.xlu0 %v1005, 24
      %v1803 = vpop.permute.xlu0 %1802
      %1804 = vrot.lane.b32.xlu0 %v1006, 24
      %v1805 = vpop.permute.xlu0 %1804
      %1806 = vrot.lane.b32.xlu0 %v1007, 24
      %v1807 = vpop.permute.xlu0 %1806
      %1872 = vrot.lane.b32.xlu0 %v1008, 28
      %v1873 = vpop.permute.xlu0 %1872
      %1874 = vrot.lane.b32.xlu0 %v1009, 28
      %v1875 = vpop.permute.xlu0 %1874
      %1876 = vrot.lane.b32.xlu0 %v1010, 28
      %v1877 = vpop.permute.xlu0 %1876
      %1878 = vrot.lane.b32.xlu0 %v1011, 28
      %v1879 = vpop.permute.xlu0 %1878
      %1880 = vrot.lane.b32.xlu0 %v1012, 28
      %v1881 = vpop.permute.xlu0 %1880
      %1882 = vrot.lane.b32.xlu0 %v1013, 28
      %v1883 = vpop.permute.xlu0 %1882
      %1884 = vrot.lane.b32.xlu0 %v1014, 28
      %v1885 = vpop.permute.xlu0 %1884
      %1886 = vrot.lane.b32.xlu0 %v1015, 28
      %v1887 = vpop.permute.xlu0 %1886
      %1888 = vrot.lane.b32.xlu0 %v1016, 28
      %v1889 = vpop.permute.xlu0 %1888
      %1890 = vrot.lane.b32.xlu0 %v1017, 28
      %v1891 = vpop.permute.xlu0 %1890
      %1892 = vrot.lane.b32.xlu0 %v1018, 28
      %v1893 = vpop.permute.xlu0 %1892
      %1894 = vrot.lane.b32.xlu0 %v1019, 28
      %v1895 = vpop.permute.xlu0 %1894
      %1896 = vrot.lane.b32.xlu0 %v1020, 28
      %v1897 = vpop.permute.xlu0 %1896
      %1898 = vrot.lane.b32.xlu0 %v1021, 28
      %v1899 = vpop.permute.xlu0 %1898
      %1900 = vrot.lane.b32.xlu0 %v1022, 28
      %v1901 = vpop.permute.xlu0 %1900
      %1902 = vrot.lane.b32.xlu0 %v1023, 28
      %v1903 = vpop.permute.xlu0 %1902
      %1904 = vrot.lane.b32.xlu0 %v1024, 28
      %v1905 = vpop.permute.xlu0 %1904
      %1906 = vrot.lane.b32.xlu0 %v1025, 28
      %v1907 = vpop.permute.xlu0 %1906
      %1908 = vrot.lane.b32.xlu0 %v1026, 28
      %v1909 = vpop.permute.xlu0 %1908
      %1910 = vrot.lane.b32.xlu0 %v1027, 28
      %v1911 = vpop.permute.xlu0 %1910
      %1912 = vrot.lane.b32.xlu0 %v1028, 28
      %v1913 = vpop.permute.xlu0 %1912
      %1914 = vrot.lane.b32.xlu0 %v1029, 28
      %v1915 = vpop.permute.xlu0 %1914
      %1916 = vrot.lane.b32.xlu0 %v1030, 28
      %v1917 = vpop.permute.xlu0 %1916
      %1918 = vrot.lane.b32.xlu0 %v1031, 28
      %v1919 = vpop.permute.xlu0 %1918
      %1920 = vrot.lane.b32.xlu0 %v1032, 28
      %v1921 = vpop.permute.xlu0 %1920
      %1922 = vrot.lane.b32.xlu0 %v1033, 28
      %v1923 = vpop.permute.xlu0 %1922
      %1924 = vrot.lane.b32.xlu0 %v1034, 28
      %v1925 = vpop.permute.xlu0 %1924
      %1926 = vrot.lane.b32.xlu0 %v1035, 28
      %v1927 = vpop.permute.xlu0 %1926
      %1928 = vrot.lane.b32.xlu0 %v1036, 28
      %v1929 = vpop.permute.xlu0 %1928
      %1930 = vrot.lane.b32.xlu0 %v1037, 28
      %v1931 = vpop.permute.xlu0 %1930
      %1932 = vrot.lane.b32.xlu0 %v1038, 28
      %v1933 = vpop.permute.xlu0 %1932
      %1934 = vrot.lane.b32.xlu0 %v1039, 28
      %v1935 = vpop.permute.xlu0 %1934
      %2000 = vrot.lane.b32.xlu0 %v1040, 32
      %v2001 = vpop.permute.xlu0 %2000
      %2002 = vrot.lane.b32.xlu0 %v1041, 32
      %v2003 = vpop.permute.xlu0 %2002
      %2004 = vrot.lane.b32.xlu0 %v1042, 32
      %v2005 = vpop.permute.xlu0 %2004
      %2006 = vrot.lane.b32.xlu0 %v1043, 32
      %v2007 = vpop.permute.xlu0 %2006
      %2008 = vrot.lane.b32.xlu0 %v1044, 32
      %v2009 = vpop.permute.xlu0 %2008
      %2010 = vrot.lane.b32.xlu0 %v1045, 32
      %v2011 = vpop.permute.xlu0 %2010
      %2012 = vrot.lane.b32.xlu0 %v1046, 32
      %v2013 = vpop.permute.xlu0 %2012
      %2014 = vrot.lane.b32.xlu0 %v1047, 32
      %v2015 = vpop.permute.xlu0 %2014
      %2016 = vrot.lane.b32.xlu0 %v1048, 32
      %v2017 = vpop.permute.xlu0 %2016
      %2018 = vrot.lane.b32.xlu0 %v1049, 32
      %v2019 = vpop.permute.xlu0 %2018
      %2020 = vrot.lane.b32.xlu0 %v1050, 32
      %v2021 = vpop.permute.xlu0 %2020
      %2022 = vrot.lane.b32.xlu0 %v1051, 32
      %v2023 = vpop.permute.xlu0 %2022
      %2024 = vrot.lane.b32.xlu0 %v1052, 32
      %v2025 = vpop.permute.xlu0 %2024
      %2026 = vrot.lane.b32.xlu0 %v1053, 32
      %v2027 = vpop.permute.xlu0 %2026
      %2028 = vrot.lane.b32.xlu0 %v1054, 32
      %v2029 = vpop.permute.xlu0 %2028
      %2030 = vrot.lane.b32.xlu0 %v1055, 32
      %v2031 = vpop.permute.xlu0 %2030
      %2032 = vrot.lane.b32.xlu0 %v1056, 32
      %v2033 = vpop.permute.xlu0 %2032
      %2034 = vrot.lane.b32.xlu0 %v1057, 32
      %v2035 = vpop.permute.xlu0 %2034
      %2036 = vrot.lane.b32.xlu0 %v1058, 32
      %v2037 = vpop.permute.xlu0 %2036
      %2038 = vrot.lane.b32.xlu0 %v1059, 32
      %v2039 = vpop.permute.xlu0 %2038
      %2040 = vrot.lane.b32.xlu0 %v1060, 32
      %v2041 = vpop.permute.xlu0 %2040
      %2042 = vrot.lane.b32.xlu0 %v1061, 32
      %v2043 = vpop.permute.xlu0 %2042
      %2044 = vrot.lane.b32.xlu0 %v1062, 32
      %v2045 = vpop.permute.xlu0 %2044
      %2046 = vrot.lane.b32.xlu0 %v1063, 32
      %v2047 = vpop.permute.xlu0 %2046
      %2048 = vrot.lane.b32.xlu0 %v1064, 32
      %v2049 = vpop.permute.xlu0 %2048
      %2050 = vrot.lane.b32.xlu0 %v1065, 32
      %v2051 = vpop.permute.xlu0 %2050
      %2052 = vrot.lane.b32.xlu0 %v1066, 32
      %v2053 = vpop.permute.xlu0 %2052
      %2054 = vrot.lane.b32.xlu0 %v1067, 32
      %v2055 = vpop.permute.xlu0 %2054
      %2056 = vrot.lane.b32.xlu0 %v1068, 32
      %v2057 = vpop.permute.xlu0 %2056
      %2058 = vrot.lane.b32.xlu0 %v1069, 32
      %v2059 = vpop.permute.xlu0 %2058
      %2060 = vrot.lane.b32.xlu0 %v1070, 32
      %v2061 = vpop.permute.xlu0 %2060
      %2062 = vrot.lane.b32.xlu0 %v1071, 32
      %v2063 = vpop.permute.xlu0 %2062
      %v2096 = vsel %vm750, %v783, %v1105
      %v2097 = vsel %vm750, %v784, %v1107
      %v2098 = vsel %vm750, %v785, %v1109
      %v2099 = vsel %vm750, %v786, %v1111
      %v2100 = vsel %vm750, %v787, %v1113
      %v2101 = vsel %vm750, %v788, %v1115
      %v2102 = vsel %vm750, %v789, %v1117
      %v2103 = vsel %vm750, %v790, %v1119
      %v2104 = vsel %vm750, %v791, %v1121
      %v2105 = vsel %vm750, %v792, %v1123
      %v2106 = vsel %vm750, %v793, %v1125
      %v2107 = vsel %vm750, %v794, %v1127
      %v2108 = vsel %vm750, %v795, %v1129
      %v2109 = vsel %vm750, %v796, %v1131
      %v2110 = vsel %vm750, %v797, %v1133
      %v2111 = vsel %vm750, %v798, %v1135
      %v2112 = vsel %vm750, %v799, %v1137
      %v2113 = vsel %vm750, %v800, %v1139
      %v2114 = vsel %vm750, %v801, %v1141
      %v2115 = vsel %vm750, %v802, %v1143
      %v2116 = vsel %vm750, %v803, %v1145
      %v2117 = vsel %vm750, %v804, %v1147
      %v2118 = vsel %vm750, %v805, %v1149
      %v2119 = vsel %vm750, %v806, %v1151
      %v2120 = vsel %vm750, %v807, %v1153
      %v2121 = vsel %vm750, %v808, %v1155
      %v2122 = vsel %vm750, %v809, %v1157
      %v2123 = vsel %vm750, %v810, %v1159
      %v2124 = vsel %vm750, %v811, %v1161
      %v2125 = vsel %vm750, %v812, %v1163
      %v2126 = vsel %vm750, %v813, %v1165
      %v2127 = vsel %vm750, %v814, %v1167
      %v2128 = vsel %vm471, %v2096, %v1233
      %v2129 = vsel %vm471, %v2097, %v1235
      %v2130 = vsel %vm471, %v2098, %v1237
      %v2131 = vsel %vm471, %v2099, %v1239
      %v2132 = vsel %vm471, %v2100, %v1241
      %v2133 = vsel %vm471, %v2101, %v1243
      %v2134 = vsel %vm471, %v2102, %v1245
      %v2135 = vsel %vm471, %v2103, %v1247
      %v2136 = vsel %vm471, %v2104, %v1249
      %v2137 = vsel %vm471, %v2105, %v1251
      %v2138 = vsel %vm471, %v2106, %v1253
      %v2139 = vsel %vm471, %v2107, %v1255
      %v2140 = vsel %vm471, %v2108, %v1257
      %v2141 = vsel %vm471, %v2109, %v1259
      %v2142 = vsel %vm471, %v2110, %v1261
      %v2143 = vsel %vm471, %v2111, %v1263
      %v2144 = vsel %vm471, %v2112, %v1265
      %v2145 = vsel %vm471, %v2113, %v1267
      %v2146 = vsel %vm471, %v2114, %v1269
      %v2147 = vsel %vm471, %v2115, %v1271
      %v2148 = vsel %vm471, %v2116, %v1273
      %v2149 = vsel %vm471, %v2117, %v1275
      %v2150 = vsel %vm471, %v2118, %v1277
      %v2151 = vsel %vm471, %v2119, %v1279
      %v2152 = vsel %vm471, %v2120, %v1281
      %v2153 = vsel %vm471, %v2121, %v1283
      %v2154 = vsel %vm471, %v2122, %v1285
      %v2155 = vsel %vm471, %v2123, %v1287
      %v2156 = vsel %vm471, %v2124, %v1289
      %v2157 = vsel %vm471, %v2125, %v1291
      %v2158 = vsel %vm471, %v2126, %v1293
      %v2159 = vsel %vm471, %v2127, %v1295
      %vm2160 = vcmask 97280
      %v2161 = vsel %vm2160, %v2128, %v1361
      %v2162 = vsel %vm2160, %v2129, %v1363
      %v2163 = vsel %vm2160, %v2130, %v1365
      %v2164 = vsel %vm2160, %v2131, %v1367
      %v2165 = vsel %vm2160, %v2132, %v1369
      %v2166 = vsel %vm2160, %v2133, %v1371
      %v2167 = vsel %vm2160, %v2134, %v1373
      %v2168 = vsel %vm2160, %v2135, %v1375
      %v2169 = vsel %vm2160, %v2136, %v1377
      %v2170 = vsel %vm2160, %v2137, %v1379
      %v2171 = vsel %vm2160, %v2138, %v1381
      %v2172 = vsel %vm2160, %v2139, %v1383
      %v2173 = vsel %vm2160, %v2140, %v1385
      %v2174 = vsel %vm2160, %v2141, %v1387
      %v2175 = vsel %vm2160, %v2142, %v1389
      %v2176 = vsel %vm2160, %v2143, %v1391
      %v2177 = vsel %vm2160, %v2144, %v1393
      %v2178 = vsel %vm2160, %v2145, %v1395
      %v2179 = vsel %vm2160, %v2146, %v1397
      %v2180 = vsel %vm2160, %v2147, %v1399
      %v2181 = vsel %vm2160, %v2148, %v1401
      %v2182 = vsel %vm2160, %v2149, %v1403
      %v2183 = vsel %vm2160, %v2150, %v1405
      %v2184 = vsel %vm2160, %v2151, %v1407
      %v2185 = vsel %vm2160, %v2152, %v1409
      %v2186 = vsel %vm2160, %v2153, %v1411
      %v2187 = vsel %vm2160, %v2154, %v1413
      %v2188 = vsel %vm2160, %v2155, %v1415
      %v2189 = vsel %vm2160, %v2156, %v1417
      %v2190 = vsel %vm2160, %v2157, %v1419
      %v2191 = vsel %vm2160, %v2158, %v1421
      %v2192 = vsel %vm2160, %v2159, %v1423
      %vm2193 = vcmask 130048
      %v2194 = vsel %vm2193, %v2161, %v1489
      %v2195 = vsel %vm2193, %v2162, %v1491
      %v2196 = vsel %vm2193, %v2163, %v1493
      %v2197 = vsel %vm2193, %v2164, %v1495
      %v2198 = vsel %vm2193, %v2165, %v1497
      %v2199 = vsel %vm2193, %v2166, %v1499
      %v2200 = vsel %vm2193, %v2167, %v1501
      %v2201 = vsel %vm2193, %v2168, %v1503
      %v2202 = vsel %vm2193, %v2169, %v1505
      %v2203 = vsel %vm2193, %v2170, %v1507
      %v2204 = vsel %vm2193, %v2171, %v1509
      %v2205 = vsel %vm2193, %v2172, %v1511
      %v2206 = vsel %vm2193, %v2173, %v1513
      %v2207 = vsel %vm2193, %v2174, %v1515
      %v2208 = vsel %vm2193, %v2175, %v1517
      %v2209 = vsel %vm2193, %v2176, %v1519
      %v2210 = vsel %vm2193, %v2177, %v1521
      %v2211 = vsel %vm2193, %v2178, %v1523
      %v2212 = vsel %vm2193, %v2179, %v1525
      %v2213 = vsel %vm2193, %v2180, %v1527
      %v2214 = vsel %vm2193, %v2181, %v1529
      %v2215 = vsel %vm2193, %v2182, %v1531
      %v2216 = vsel %vm2193, %v2183, %v1533
      %v2217 = vsel %vm2193, %v2184, %v1535
      %v2218 = vsel %vm2193, %v2185, %v1537
      %v2219 = vsel %vm2193, %v2186, %v1539
      %v2220 = vsel %vm2193, %v2187, %v1541
      %v2221 = vsel %vm2193, %v2188, %v1543
      %v2222 = vsel %vm2193, %v2189, %v1545
      %v2223 = vsel %vm2193, %v2190, %v1547
      %v2224 = vsel %vm2193, %v2191, %v1549
      %v2225 = vsel %vm2193, %v2192, %v1551
      %vm2226 = vcmask 162816
      %v2227 = vsel %vm2226, %v2194, %v1617
      %v2228 = vsel %vm2226, %v2195, %v1619
      %v2229 = vsel %vm2226, %v2196, %v1621
      %v2230 = vsel %vm2226, %v2197, %v1623
      %v2231 = vsel %vm2226, %v2198, %v1625
      %v2232 = vsel %vm2226, %v2199, %v1627
      %v2233 = vsel %vm2226, %v2200, %v1629
      %v2234 = vsel %vm2226, %v2201, %v1631
      %v2235 = vsel %vm2226, %v2202, %v1633
      %v2236 = vsel %vm2226, %v2203, %v1635
      %v2237 = vsel %vm2226, %v2204, %v1637
      %v2238 = vsel %vm2226, %v2205, %v1639
      %v2239 = vsel %vm2226, %v2206, %v1641
      %v2240 = vsel %vm2226, %v2207, %v1643
      %v2241 = vsel %vm2226, %v2208, %v1645
      %v2242 = vsel %vm2226, %v2209, %v1647
      %v2243 = vsel %vm2226, %v2210, %v1649
      %v2244 = vsel %vm2226, %v2211, %v1651
      %v2245 = vsel %vm2226, %v2212, %v1653
      %v2246 = vsel %vm2226, %v2213, %v1655
      %v2247 = vsel %vm2226, %v2214, %v1657
      %v2248 = vsel %vm2226, %v2215, %v1659
      %v2249 = vsel %vm2226, %v2216, %v1661
      %v2250 = vsel %vm2226, %v2217, %v1663
      %v2251 = vsel %vm2226, %v2218, %v1665
      %v2252 = vsel %vm2226, %v2219, %v1667
      %v2253 = vsel %vm2226, %v2220, %v1669
      %v2254 = vsel %vm2226, %v2221, %v1671
      %v2255 = vsel %vm2226, %v2222, %v1673
      %v2256 = vsel %vm2226, %v2223, %v1675
      %v2257 = vsel %vm2226, %v2224, %v1677
      %v2258 = vsel %vm2226, %v2225, %v1679
      %vm2259 = vcmask 195584
      %v2260 = vsel %vm2259, %v2227, %v1745
      %v2261 = vsel %vm2259, %v2228, %v1747
      %v2262 = vsel %vm2259, %v2229, %v1749
      %v2263 = vsel %vm2259, %v2230, %v1751
      %v2264 = vsel %vm2259, %v2231, %v1753
      %v2265 = vsel %vm2259, %v2232, %v1755
      %v2266 = vsel %vm2259, %v2233, %v1757
      %v2267 = vsel %vm2259, %v2234, %v1759
      %v2268 = vsel %vm2259, %v2235, %v1761
      %v2269 = vsel %vm2259, %v2236, %v1763
      %v2270 = vsel %vm2259, %v2237, %v1765
      %v2271 = vsel %vm2259, %v2238, %v1767
      %v2272 = vsel %vm2259, %v2239, %v1769
      %v2273 = vsel %vm2259, %v2240, %v1771
      %v2274 = vsel %vm2259, %v2241, %v1773
      %v2275 = vsel %vm2259, %v2242, %v1775
      %v2276 = vsel %vm2259, %v2243, %v1777
      %v2277 = vsel %vm2259, %v2244, %v1779
      %v2278 = vsel %vm2259, %v2245, %v1781
      %v2279 = vsel %vm2259, %v2246, %v1783
      %v2280 = vsel %vm2259, %v2247, %v1785
      %v2281 = vsel %vm2259, %v2248, %v1787
      %v2282 = vsel %vm2259, %v2249, %v1789
      %v2283 = vsel %vm2259, %v2250, %v1791
      %v2284 = vsel %vm2259, %v2251, %v1793
      %v2285 = vsel %vm2259, %v2252, %v1795
      %v2286 = vsel %vm2259, %v2253, %v1797
      %v2287 = vsel %vm2259, %v2254, %v1799
      %v2288 = vsel %vm2259, %v2255, %v1801
      %v2289 = vsel %vm2259, %v2256, %v1803
      %v2290 = vsel %vm2259, %v2257, %v1805
      %v2291 = vsel %vm2259, %v2258, %v1807
      %vm2292 = vcmask 228352
      %v2293 = vsel %vm2292, %v2260, %v1873
      %v2294 = vsel %vm2292, %v2261, %v1875
      %v2295 = vsel %vm2292, %v2262, %v1877
      %v2296 = vsel %vm2292, %v2263, %v1879
      %v2297 = vsel %vm2292, %v2264, %v1881
      %v2298 = vsel %vm2292, %v2265, %v1883
      %v2299 = vsel %vm2292, %v2266, %v1885
      %v2300 = vsel %vm2292, %v2267, %v1887
      %v2301 = vsel %vm2292, %v2268, %v1889
      %v2302 = vsel %vm2292, %v2269, %v1891
      %v2303 = vsel %vm2292, %v2270, %v1893
      %v2304 = vsel %vm2292, %v2271, %v1895
      %v2305 = vsel %vm2292, %v2272, %v1897
      %v2306 = vsel %vm2292, %v2273, %v1899
      %v2307 = vsel %vm2292, %v2274, %v1901
      %v2308 = vsel %vm2292, %v2275, %v1903
      %v2309 = vsel %vm2292, %v2276, %v1905
      %v2310 = vsel %vm2292, %v2277, %v1907
      %v2311 = vsel %vm2292, %v2278, %v1909
      %v2312 = vsel %vm2292, %v2279, %v1911
      %v2313 = vsel %vm2292, %v2280, %v1913
      %v2314 = vsel %vm2292, %v2281, %v1915
      %v2315 = vsel %vm2292, %v2282, %v1917
      %v2316 = vsel %vm2292, %v2283, %v1919
      %v2317 = vsel %vm2292, %v2284, %v1921
      %v2318 = vsel %vm2292, %v2285, %v1923
      %v2319 = vsel %vm2292, %v2286, %v1925
      %v2320 = vsel %vm2292, %v2287, %v1927
      %v2321 = vsel %vm2292, %v2288, %v1929
      %v2322 = vsel %vm2292, %v2289, %v1931
      %v2323 = vsel %vm2292, %v2290, %v1933
      %v2324 = vsel %vm2292, %v2291, %v1935
      %vm2325 = vcmask 261120
      %v2326 = vsel %vm2325, %v2293, %v2001
      %v2327 = vsel %vm2325, %v2294, %v2003
      %v2328 = vsel %vm2325, %v2295, %v2005
      %v2329 = vsel %vm2325, %v2296, %v2007
      %v2330 = vsel %vm2325, %v2297, %v2009
      %v2331 = vsel %vm2325, %v2298, %v2011
      %v2332 = vsel %vm2325, %v2299, %v2013
      %v2333 = vsel %vm2325, %v2300, %v2015
      %v2334 = vsel %vm2325, %v2301, %v2017
      %v2335 = vsel %vm2325, %v2302, %v2019
      %v2336 = vsel %vm2325, %v2303, %v2021
      %v2337 = vsel %vm2325, %v2304, %v2023
      %v2338 = vsel %vm2325, %v2305, %v2025
      %v2339 = vsel %vm2325, %v2306, %v2027
      %v2340 = vsel %vm2325, %v2307, %v2029
      %v2341 = vsel %vm2325, %v2308, %v2031
      %v2342 = vsel %vm2325, %v2309, %v2033
      %v2343 = vsel %vm2325, %v2310, %v2035
      %v2344 = vsel %vm2325, %v2311, %v2037
      %v2345 = vsel %vm2325, %v2312, %v2039
      %v2346 = vsel %vm2325, %v2313, %v2041
      %v2347 = vsel %vm2325, %v2314, %v2043
      %v2348 = vsel %vm2325, %v2315, %v2045
      %v2349 = vsel %vm2325, %v2316, %v2047
      %v2350 = vsel %vm2325, %v2317, %v2049
      %v2351 = vsel %vm2325, %v2318, %v2051
      %v2352 = vsel %vm2325, %v2319, %v2053
      %v2353 = vsel %vm2325, %v2320, %v2055
      %v2354 = vsel %vm2325, %v2321, %v2057
      %v2355 = vsel %vm2325, %v2322, %v2059
      %v2356 = vsel %vm2325, %v2323, %v2061
      %v2357 = vsel %vm2325, %v2324, %v2063
      %v2358 = vpack.c.bf16 %v2327, %v2326
      %v2359 = vpack.c.bf16 %v2329, %v2328
      %v2360 = vpack.c.bf16 %v2331, %v2330
      %v2361 = vpack.c.bf16 %v2333, %v2332
      %v2362 = vpack.c.bf16 %v2335, %v2334
      %v2363 = vpack.c.bf16 %v2337, %v2336
      %v2364 = vpack.c.bf16 %v2339, %v2338
      %v2365 = vpack.c.bf16 %v2341, %v2340
      %v2366 = vpack.c.bf16 %v2343, %v2342
      %v2367 = vpack.c.bf16 %v2345, %v2344
      %v2368 = vpack.c.bf16 %v2347, %v2346
      %v2369 = vpack.c.bf16 %v2349, %v2348
      %v2370 = vpack.c.bf16 %v2351, %v2350
      %v2371 = vpack.c.bf16 %v2353, %v2352
      %v2372 = vpack.c.bf16 %v2355, %v2354
      %v2373 = vpack.c.bf16 %v2357, %v2356
      %v2374 = vld [vmem:[%s293] sm:$0xf]
      %v2375 = vld [vmem:[%s293 + $0x4] sm:$0xf]
      %v2376 = vld [vmem:[%s293 + $0x8] sm:$0xf]
      %v2377 = vld [vmem:[%s293 + $0xc] sm:$0xf]
      %v2378 = vld [vmem:[%s293 + $0x10] sm:$0x3]
      %v2379 = vld [vmem:[%s296] sm:$0x1]
      %v2381 = vlaneseq
      %v2382 = vshrl.u32 %v2381, 7
      %v2383 = vsub.s32 0, %v2382
      %v2384 = vrot.slane %v2379, %v2383
      %v2391 = vunpack.c.l.b16 %v2374
      %v2392 = vunpack.c.l.b16 %v2375
      %v2393 = vunpack.c.l.b16 %v2376
      %v2394 = vunpack.c.l.b16 %v2377
      %v2395 = vunpack.c.l.b16 %v2378
      %v2396 = vpack.c.b16 %v2392, %v2391
      %v2397 = vpack.c.b16 %v2394, %v2393
      %v2398 = vpack.c.b16 %v2395, %v2395
      %vm2401 = vcmask 293888
      %v2403 = vsel %vm2401, %v2358, 0
      %v2406 = vsel %vm2401, %v2359, 0
      %v2409 = vsel %vm2401, %v2360, 0
      %v2412 = vsel %vm2401, %v2361, 0
      %v2415 = vsel %vm2401, %v2362, 0
      %v2418 = vsel %vm2401, %v2363, 0
      %v2421 = vsel %vm2401, %v2364, 0
      %v2424 = vsel %vm2401, %v2365, 0
      %v2427 = vsel %vm2401, %v2366, 0
      %v2430 = vsel %vm2401, %v2367, 0
      %v2433 = vsel %vm2401, %v2368, 0
      %v2436 = vsel %vm2401, %v2369, 0
      %v2439 = vsel %vm2401, %v2370, 0
      %v2442 = vsel %vm2401, %v2371, 0
      %v2445 = vsel %vm2401, %v2372, 0
      %v2448 = vsel %vm2401, %v2373, 0
      %vm2450 = vcmask 1041408
      %v2452 = vsel %vm2450, %v2398, 0
      %2454 = vmatprep.subr.bf16.mxu0 0
      %2455 = vmatpush1.bf16.msra.mxu0 0
      %2456 = vmatprep.subr.bf16.mxu0 0
      %2457 = vmatpush1.bf16.msra.mxu0 0
      %2458 = vmatprep.subr.bf16.mxu0 0
      %2459 = vmatpush1.bf16.msra.mxu0 0
      %2460 = vmatprep.subr.bf16.mxu0 0
      %2461 = vmatpush1.bf16.msra.mxu0 0
      %2462 = vmatprep.subr.bf16.mxu0 0
      %2463 = vmatpush1.bf16.msra.mxu0 0
      %2464 = vmatprep.subr.bf16.mxu0 0
      %2465 = vmatpush1.bf16.msra.mxu0 %v2452
      %2466 = vmatprep.subr.bf16.mxu0 0
      %2467 = vmatpush1.bf16.msra.mxu0 %v2397
      %2468 = vmatprep.subr.bf16.mxu0 0
      %2469 = vmatpush1.bf16.msra.mxu0 %v2396
      %2470 = vmatprep.subr.bf16.mxu0 0
      %2471 = vmatpush2.bf16.msra.mxu0 0
      %2472 = vmatprep.subr.bf16.mxu0 0
      %2473 = vmatpush2.bf16.msra.mxu0 0
      %2474 = vmatprep.subr.bf16.mxu0 0
      %2475 = vmatpush2.bf16.msra.mxu0 0
      %2476 = vmatprep.subr.bf16.mxu0 0
      %2477 = vmatpush2.bf16.msra.mxu0 0
      %2478 = vmatprep.subr.bf16.mxu0 0
      %2479 = vmatpush2.bf16.msra.mxu0 0
      %2480 = vmatprep.subr.bf16.mxu0 0
      %2481 = vmatpush2.bf16.msra.mxu0 0
      %2482 = vmatprep.subr.bf16.mxu0 0
      %2483 = vmatpush2.bf16.msra.mxu0 0
      %2484 = vmatprep.subr.bf16.mxu0 0
      %2485 = vmatpush2.bf16.msra.mxu0 0
      %2486 = vmatprep.mubr.bf16.mxu0 0
      %2487 = vmatmul.mubr.bf16.gmra.mxu0 %v2403
      %v2488 = vpop.f32.mrf.mxu0
      %v2489 = vadd.f32 %v2384, %v2488
      %v2490 = vpop.f32.mrf.mxu0
      %v2491 = vpop.f32.mrf.mxu0
      %v2492 = vadd.f32 %v2384, %v2491
      %v2493 = vpop.f32.mrf.mxu0
      %2494 = vmatprep.mubr.bf16.mxu0 0
      %2495 = vmatmul.mubr.bf16.gmra.mxu0 %v2406
      %v2496 = vpop.f32.mrf.mxu0
      %v2497 = vadd.f32 %v2384, %v2496
      %v2498 = vpop.f32.mrf.mxu0
      %v2499 = vpop.f32.mrf.mxu0
      %v2500 = vadd.f32 %v2384, %v2499
      %v2501 = vpop.f32.mrf.mxu0
      %2502 = vmatprep.mubr.bf16.mxu0 0
      %2503 = vmatmul.mubr.bf16.gmra.mxu0 %v2409
      %v2504 = vpop.f32.mrf.mxu0
      %v2505 = vadd.f32 %v2384, %v2504
      %v2506 = vpop.f32.mrf.mxu0
      %v2507 = vpop.f32.mrf.mxu0
      %v2508 = vadd.f32 %v2384, %v2507
      %v2509 = vpop.f32.mrf.mxu0
      %2510 = vmatprep.mubr.bf16.mxu0 0
      %2511 = vmatmul.mubr.bf16.gmra.mxu0 %v2412
      %v2512 = vpop.f32.mrf.mxu0
      %v2513 = vadd.f32 %v2384, %v2512
      %v2514 = vpop.f32.mrf.mxu0
      %v2515 = vpop.f32.mrf.mxu0
      %v2516 = vadd.f32 %v2384, %v2515
      %v2517 = vpop.f32.mrf.mxu0
      %2518 = vmatprep.mubr.bf16.mxu0 0
      %2519 = vmatmul.mubr.bf16.gmra.mxu0 %v2415
      %v2520 = vpop.f32.mrf.mxu0
      %v2521 = vadd.f32 %v2384, %v2520
      %v2522 = vpop.f32.mrf.mxu0
      %v2523 = vpop.f32.mrf.mxu0
      %v2524 = vadd.f32 %v2384, %v2523
      %v2525 = vpop.f32.mrf.mxu0
      %2526 = vmatprep.mubr.bf16.mxu0 0
      %2527 = vmatmul.mubr.bf16.gmra.mxu0 %v2418
      %v2528 = vpop.f32.mrf.mxu0
      %v2529 = vadd.f32 %v2384, %v2528
      %v2530 = vpop.f32.mrf.mxu0
      %v2531 = vpop.f32.mrf.mxu0
      %v2532 = vadd.f32 %v2384, %v2531
      %v2533 = vpop.f32.mrf.mxu0
      %2534 = vmatprep.mubr.bf16.mxu0 0
      %2535 = vmatmul.mubr.bf16.gmra.mxu0 %v2421
      %v2536 = vpop.f32.mrf.mxu0
      %v2537 = vadd.f32 %v2384, %v2536
      %v2538 = vpop.f32.mrf.mxu0
      %v2539 = vpop.f32.mrf.mxu0
      %v2540 = vadd.f32 %v2384, %v2539
      %v2541 = vpop.f32.mrf.mxu0
      %2542 = vmatprep.mubr.bf16.mxu0 0
      %2543 = vmatmul.mubr.bf16.gmra.mxu0 %v2424
      %v2544 = vpop.f32.mrf.mxu0
      %v2545 = vadd.f32 %v2384, %v2544
      %v2546 = vpop.f32.mrf.mxu0
      %v2547 = vpop.f32.mrf.mxu0
      %v2548 = vadd.f32 %v2384, %v2547
      %v2549 = vpop.f32.mrf.mxu0
      %2550 = vmatprep.mubr.bf16.mxu0 0
      %2551 = vmatmul.mubr.bf16.gmra.mxu0 %v2427
      %v2552 = vpop.f32.mrf.mxu0
      %v2553 = vadd.f32 %v2384, %v2552
      %v2554 = vpop.f32.mrf.mxu0
      %v2555 = vpop.f32.mrf.mxu0
      %v2556 = vadd.f32 %v2384, %v2555
      %v2557 = vpop.f32.mrf.mxu0
      %2558 = vmatprep.mubr.bf16.mxu0 0
      %2559 = vmatmul.mubr.bf16.gmra.mxu0 %v2430
      %v2560 = vpop.f32.mrf.mxu0
      %v2561 = vadd.f32 %v2384, %v2560
      %v2562 = vpop.f32.mrf.mxu0
      %v2563 = vpop.f32.mrf.mxu0
      %v2564 = vadd.f32 %v2384, %v2563
      %v2565 = vpop.f32.mrf.mxu0
      %2566 = vmatprep.mubr.bf16.mxu0 0
      %2567 = vmatmul.mubr.bf16.gmra.mxu0 %v2433
      %v2568 = vpop.f32.mrf.mxu0
      %v2569 = vadd.f32 %v2384, %v2568
      %v2570 = vpop.f32.mrf.mxu0
      %v2571 = vpop.f32.mrf.mxu0
      %v2572 = vadd.f32 %v2384, %v2571
      %v2573 = vpop.f32.mrf.mxu0
      %2574 = vmatprep.mubr.bf16.mxu0 0
      %2575 = vmatmul.mubr.bf16.gmra.mxu0 %v2436
      %v2576 = vpop.f32.mrf.mxu0
      %v2577 = vadd.f32 %v2384, %v2576
      %v2578 = vpop.f32.mrf.mxu0
      %v2579 = vpop.f32.mrf.mxu0
      %v2580 = vadd.f32 %v2384, %v2579
      %v2581 = vpop.f32.mrf.mxu0
      %2582 = vmatprep.mubr.bf16.mxu0 0
      %2583 = vmatmul.mubr.bf16.gmra.mxu0 %v2439
      %v2584 = vpop.f32.mrf.mxu0
      %v2585 = vadd.f32 %v2384, %v2584
      %v2586 = vpop.f32.mrf.mxu0
      %v2587 = vpop.f32.mrf.mxu0
      %v2588 = vadd.f32 %v2384, %v2587
      %v2589 = vpop.f32.mrf.mxu0
      %2590 = vmatprep.mubr.bf16.mxu0 0
      %2591 = vmatmul.mubr.bf16.gmra.mxu0 %v2442
      %v2592 = vpop.f32.mrf.mxu0
      %v2593 = vadd.f32 %v2384, %v2592
      %v2594 = vpop.f32.mrf.mxu0
      %v2595 = vpop.f32.mrf.mxu0
      %v2596 = vadd.f32 %v2384, %v2595
      %v2597 = vpop.f32.mrf.mxu0
      %2598 = vmatprep.mubr.bf16.mxu0 0
      %2599 = vmatmul.mubr.bf16.gmra.mxu0 %v2445
      %v2600 = vpop.f32.mrf.mxu0
      %v2601 = vadd.f32 %v2384, %v2600
      %v2602 = vpop.f32.mrf.mxu0
      %v2603 = vpop.f32.mrf.mxu0
      %v2604 = vadd.f32 %v2384, %v2603
      %v2605 = vpop.f32.mrf.mxu0
      %2606 = vmatprep.mubr.bf16.mxu0 0
      %2607 = vmatmul.mubr.bf16.gmra.mxu0 %v2448
      %v2608 = vpop.f32.mrf.mxu0
      %v2609 = vadd.f32 %v2384, %v2608
      %v2610 = vpop.f32.mrf.mxu0
      %v2611 = vpop.f32.mrf.mxu0
      %v2612 = vadd.f32 %v2384, %v2611
      %v2613 = vpop.f32.mrf.mxu0
      %2614 = vdwg.mxu0
      %v2615 = vmul.f32 %v2489, 0.1
      %v2616 = vmul.f32 %v2492, 0.1
      %v2617 = vmul.f32 %v2497, 0.1
      %v2618 = vmul.f32 %v2500, 0.1
      %v2619 = vmul.f32 %v2505, 0.1
      %v2620 = vmul.f32 %v2508, 0.1
      %v2621 = vmul.f32 %v2513, 0.1
      %v2622 = vmul.f32 %v2516, 0.1
      %v2623 = vmul.f32 %v2521, 0.1
      %v2624 = vmul.f32 %v2524, 0.1
      %v2625 = vmul.f32 %v2529, 0.1
      %v2626 = vmul.f32 %v2532, 0.1
      %v2627 = vmul.f32 %v2537, 0.1
      %v2628 = vmul.f32 %v2540, 0.1
      %v2629 = vmul.f32 %v2545, 0.1
      %v2630 = vmul.f32 %v2548, 0.1
      %v2631 = vmul.f32 %v2553, 0.1
      %v2632 = vmul.f32 %v2556, 0.1
      %v2633 = vmul.f32 %v2561, 0.1
      %v2634 = vmul.f32 %v2564, 0.1
      %v2635 = vmul.f32 %v2569, 0.1
      %v2636 = vmul.f32 %v2572, 0.1
      %v2637 = vmul.f32 %v2577, 0.1
      %v2638 = vmul.f32 %v2580, 0.1
      %v2639 = vmul.f32 %v2585, 0.1
      %v2640 = vmul.f32 %v2588, 0.1
      %v2641 = vmul.f32 %v2593, 0.1
      %v2642 = vmul.f32 %v2596, 0.1
      %v2643 = vmul.f32 %v2601, 0.1
      %v2644 = vmul.f32 %v2604, 0.1
      %v2645 = vmul.f32 %v2609, 0.1
      %v2646 = vmul.f32 %v2612, 0.1
      %v2647 = vmax.f32 %v2489, %v2615
      %v2648 = vmax.f32 %v2492, %v2616
      %v2649 = vmax.f32 %v2497, %v2617
      %v2650 = vmax.f32 %v2500, %v2618
      %v2651 = vmax.f32 %v2505, %v2619
      %v2652 = vmax.f32 %v2508, %v2620
      %v2653 = vmax.f32 %v2513, %v2621
      %v2654 = vmax.f32 %v2516, %v2622
      %v2655 = vmax.f32 %v2521, %v2623
      %v2656 = vmax.f32 %v2524, %v2624
      %v2657 = vmax.f32 %v2529, %v2625
      %v2658 = vmax.f32 %v2532, %v2626
      %v2659 = vmax.f32 %v2537, %v2627
      %v2660 = vmax.f32 %v2540, %v2628
      %v2661 = vmax.f32 %v2545, %v2629
      %v2662 = vmax.f32 %v2548, %v2630
      %v2663 = vmax.f32 %v2553, %v2631
      %v2664 = vmax.f32 %v2556, %v2632
      %v2665 = vmax.f32 %v2561, %v2633
      %v2666 = vmax.f32 %v2564, %v2634
      %v2667 = vmax.f32 %v2569, %v2635
      %v2668 = vmax.f32 %v2572, %v2636
      %v2669 = vmax.f32 %v2577, %v2637
      %v2670 = vmax.f32 %v2580, %v2638
      %v2671 = vmax.f32 %v2585, %v2639
      %v2672 = vmax.f32 %v2588, %v2640
      %v2673 = vmax.f32 %v2593, %v2641
      %v2674 = vmax.f32 %v2596, %v2642
      %v2675 = vmax.f32 %v2601, %v2643
      %v2676 = vmax.f32 %v2604, %v2644
      %v2677 = vmax.f32 %v2609, %v2645
      %v2678 = vmax.f32 %v2612, %v2646
      %v2679 = vadd.f32 %v415, %v2647
      %v2680 = vadd.f32 %v416, %v2648
      %v2681 = vadd.f32 %v417, %v2649
      %v2682 = vadd.f32 %v418, %v2650
      %v2683 = vadd.f32 %v419, %v2651
      %v2684 = vadd.f32 %v420, %v2652
      %v2685 = vadd.f32 %v421, %v2653
      %v2686 = vadd.f32 %v422, %v2654
      %v2687 = vadd.f32 %v423, %v2655
      %v2688 = vadd.f32 %v424, %v2656
      %v2689 = vadd.f32 %v425, %v2657
      %v2690 = vadd.f32 %v426, %v2658
      %v2691 = vadd.f32 %v427, %v2659
      %v2692 = vadd.f32 %v428, %v2660
      %v2693 = vadd.f32 %v429, %v2661
      %v2694 = vadd.f32 %v430, %v2662
      %v2695 = vadd.f32 %v431, %v2663
      %v2696 = vadd.f32 %v432, %v2664
      %v2697 = vadd.f32 %v433, %v2665
      %v2698 = vadd.f32 %v434, %v2666
      %v2699 = vadd.f32 %v435, %v2667
      %v2700 = vadd.f32 %v436, %v2668
      %v2701 = vadd.f32 %v437, %v2669
      %v2702 = vadd.f32 %v438, %v2670
      %v2703 = vadd.f32 %v439, %v2671
      %v2704 = vadd.f32 %v440, %v2672
      %v2705 = vadd.f32 %v441, %v2673
      %v2706 = vadd.f32 %v442, %v2674
      %v2707 = vadd.f32 %v443, %v2675
      %v2708 = vadd.f32 %v444, %v2676
      %v2709 = vadd.f32 %v445, %v2677
      %v2710 = vadd.f32 %v446, %v2678
      %2711 = vst.msk [vmem:[#allocation2] sm:$0xff] %vm471, %v2679
      %2712 = vst.msk [vmem:[#allocation2 + $0x8] sm:$0xff] %vm471, %v2680
      %2713 = vst.msk [vmem:[#allocation2 + $0x10] sm:$0xff] %vm471, %v2681
      %2714 = vst.msk [vmem:[#allocation2 + $0x18] sm:$0xff] %vm471, %v2682
      %2715 = vst.msk [vmem:[#allocation2 + $0x20] sm:$0xff] %vm471, %v2683
      %2716 = vst.msk [vmem:[#allocation2 + $0x28] sm:$0xff] %vm471, %v2684
      %2717 = vst.msk [vmem:[#allocation2 + $0x30] sm:$0xff] %vm471, %v2685
      %2718 = vst.msk [vmem:[#allocation2 + $0x38] sm:$0xff] %vm471, %v2686
      %2719 = vst.msk [vmem:[#allocation2 + $0x40] sm:$0xff] %vm471, %v2687
      %2720 = vst.msk [vmem:[#allocation2 + $0x48] sm:$0xff] %vm471, %v2688
      %2721 = vst.msk [vmem:[#allocation2 + $0x50] sm:$0xff] %vm471, %v2689
      %2722 = vst.msk [vmem:[#allocation2 + $0x58] sm:$0xff] %vm471, %v2690
      %2723 = vst.msk [vmem:[#allocation2 + $0x60] sm:$0xff] %vm471, %v2691
      %2724 = vst.msk [vmem:[#allocation2 + $0x68] sm:$0xff] %vm471, %v2692
      %2725 = vst.msk [vmem:[#allocation2 + $0x70] sm:$0xff] %vm471, %v2693
      %2726 = vst.msk [vmem:[#allocation2 + $0x78] sm:$0xff] %vm471, %v2694
      %2727 = vst.msk [vmem:[#allocation2 + $0x80] sm:$0xff] %vm471, %v2695
      %2728 = vst.msk [vmem:[#allocation2 + $0x88] sm:$0xff] %vm471, %v2696
      %2729 = vst.msk [vmem:[#allocation2 + $0x90] sm:$0xff] %vm471, %v2697
      %2730 = vst.msk [vmem:[#allocation2 + $0x98] sm:$0xff] %vm471, %v2698
      %2731 = vst.msk [vmem:[#allocation2 + $0xa0] sm:$0xff] %vm471, %v2699
      %2732 = vst.msk [vmem:[#allocation2 + $0xa8] sm:$0xff] %vm471, %v2700
      %2733 = vst.msk [vmem:[#allocation2 + $0xb0] sm:$0xff] %vm471, %v2701
      %2734 = vst.msk [vmem:[#allocation2 + $0xb8] sm:$0xff] %vm471, %v2702
      %2735 = vst.msk [vmem:[#allocation2 + $0xc0] sm:$0xff] %vm471, %v2703
      %2736 = vst.msk [vmem:[#allocation2 + $0xc8] sm:$0xff] %vm471, %v2704
      %2737 = vst.msk [vmem:[#allocation2 + $0xd0] sm:$0xff] %vm471, %v2705
      %2738 = vst.msk [vmem:[#allocation2 + $0xd8] sm:$0xff] %vm471, %v2706
      %2739 = vst.msk [vmem:[#allocation2 + $0xe0] sm:$0xff] %vm471, %v2707
      %2740 = vst.msk [vmem:[#allocation2 + $0xe8] sm:$0xff] %vm471, %v2708
      %2741 = vst.msk [vmem:[#allocation2 + $0xf0] sm:$0xff] %vm471, %v2709
      %2742 = vst.msk [vmem:[#allocation2 + $0xf8] sm:$0xff] %vm471, %v2710
      %p2743 = scmp.eq.s32.totalorder %s21, 1
      // Predicated region
      $region45: #{tpu_custom_call.1} parent=39 // pred_check
        %p2744 = pneg %p2743
      $region46: #{tpu_custom_call.1} parent=39 // pred_check_branch
        %2746 = sbr.rel (%p2744) target = $region48
      $region47: #{tpu_custom_call.1} parent=39 // pred_region
        %2747 = vst.msk [vmem:[%s301] sm:$0xff] %vm471, %v2679
        %2748 = vst.msk [vmem:[%s301 + $0x8] sm:$0xff] %vm471, %v2680
        %2749 = vst.msk [vmem:[%s301 + $0x10] sm:$0xff] %vm471, %v2681
        %2750 = vst.msk [vmem:[%s301 + $0x18] sm:$0xff] %vm471, %v2682
        %2751 = vst.msk [vmem:[%s301 + $0x20] sm:$0xff] %vm471, %v2683
        %2752 = vst.msk [vmem:[%s301 + $0x28] sm:$0xff] %vm471, %v2684
        %2753 = vst.msk [vmem:[%s301 + $0x30] sm:$0xff] %vm471, %v2685
        %2754 = vst.msk [vmem:[%s301 + $0x38] sm:$0xff] %vm471, %v2686
        %2755 = vst.msk [vmem:[%s301 + $0x40] sm:$0xff] %vm471, %v2687
        %2756 = vst.msk [vmem:[%s301 + $0x48] sm:$0xff] %vm471, %v2688
        %2757 = vst.msk [vmem:[%s301 + $0x50] sm:$0xff] %vm471, %v2689
        %2758 = vst.msk [vmem:[%s301 + $0x58] sm:$0xff] %vm471, %v2690
        %2759 = vst.msk [vmem:[%s301 + $0x60] sm:$0xff] %vm471, %v2691
        %2760 = vst.msk [vmem:[%s301 + $0x68] sm:$0xff] %vm471, %v2692
        %2761 = vst.msk [vmem:[%s301 + $0x70] sm:$0xff] %vm471, %v2693
        %2762 = vst.msk [vmem:[%s301 + $0x78] sm:$0xff] %vm471, %v2694
        %2763 = vst.msk [vmem:[%s301 + $0x80] sm:$0xff] %vm471, %v2695
        %2764 = vst.msk [vmem:[%s301 + $0x88] sm:$0xff] %vm471, %v2696
        %2765 = vst.msk [vmem:[%s301 + $0x90] sm:$0xff] %vm471, %v2697
        %2766 = vst.msk [vmem:[%s301 + $0x98] sm:$0xff] %vm471, %v2698
        %2767 = vst.msk [vmem:[%s301 + $0xa0] sm:$0xff] %vm471, %v2699
        %2768 = vst.msk [vmem:[%s301 + $0xa8] sm:$0xff] %vm471, %v2700
        %2769 = vst.msk [vmem:[%s301 + $0xb0] sm:$0xff] %vm471, %v2701
        %2770 = vst.msk [vmem:[%s301 + $0xb8] sm:$0xff] %vm471, %v2702
        %2771 = vst.msk [vmem:[%s301 + $0xc0] sm:$0xff] %vm471, %v2703
        %2772 = vst.msk [vmem:[%s301 + $0xc8] sm:$0xff] %vm471, %v2704
        %2773 = vst.msk [vmem:[%s301 + $0xd0] sm:$0xff] %vm471, %v2705
        %2774 = vst.msk [vmem:[%s301 + $0xd8] sm:$0xff] %vm471, %v2706
        %2775 = vst.msk [vmem:[%s301 + $0xe0] sm:$0xff] %vm471, %v2707
        %2776 = vst.msk [vmem:[%s301 + $0xe8] sm:$0xff] %vm471, %v2708
        %2777 = vst.msk [vmem:[%s301 + $0xf0] sm:$0xff] %vm471, %v2709
        %2778 = vst.msk [vmem:[%s301 + $0xf8] sm:$0xff] %vm471, %v2710
      $region48: #{tpu_custom_call.1} parent=39 // pred_fallthru
        _
      %p2779 = scmp.lt.s32.totalorder %s20, 1
      %s2780 = scalar_select %p2779, %s20, 1
      %s2781 = smul.addr %s2780, 32
      %s2782 = smul.addr %s2781, 8
      %s2783 = scalar_lea.vmem %s5, %s2782
      // Predicated region
      $region49: #{tpu_custom_call.1} parent=39 // pred_check
        %p2784 = pneg %p176
      $region50: #{tpu_custom_call.1} parent=39 // pred_check_branch
        %2786 = sbr.rel (%p2784) target = $region52
      $region51: #{tpu_custom_call.1} parent=39 // pred_region
        _
      $region52: #{tpu_custom_call.1} parent=39 // pred_fallthru
        _
    $region40: #{tpu_custom_call.1} parent=5 // pred_fallthru
      _
    %p2787 = scmp.le.s32.totalorder 2, %s11
    // Predicated region
    $region53: #{tpu_custom_call.1} parent=5 // pred_check
      %p2788 = pneg %p2787
    $region54: #{tpu_custom_call.1} parent=5 // pred_check_branch
      %2790 = sbr.rel (%p2788) target = $region56
    $region55: #{tpu_custom_call.1} parent=5 // pred_region
      %s2791 = ssub.s32 %s11, 2
      // Predicated region
      $region57: #{tpu_custom_call.1} parent=55 // pred_check
        %p2792 = pneg %p182
      $region58: #{tpu_custom_call.1} parent=55 // pred_check_branch
        %2794 = sbr.rel (%p2792) target = $region60
      $region59: #{tpu_custom_call.1} parent=55 // pred_region
        %p2795 = scmp.lt.s32.totalorder %s22, 1
        %s2796 = scalar_select %p2795, %s22, 1
        %s2797 = smul.addr %s2796, 32
        %s2798 = smul.addr %s2797, 8
        %s2799 = scalar_lea.vmem %s5, %s2798
      $region60: #{tpu_custom_call.1} parent=55 // pred_fallthru
        _
    $region56: #{tpu_custom_call.1} parent=5 // pred_fallthru
      _
  $region6: #{tpu_custom_call.1} parent=0 // loop_footer
    %s15 = sadd.s32 1, %s11
  $region7: #{tpu_custom_call.1} parent=0 // loop_footer_branch
    %10 = sbr.rel target = $region3
  $region8: #{tpu_custom_call.1} parent=0 // loop_exit
    _

</llo_original>
